<compile_context>
chip_gen: v7x
topology: tpu7x:2x2x1
jax: 0.10.0
libtpu: 0.0.40
codegen_flags: <defaults>
</compile_context>

<pallas_src>
import jax
import jax.numpy as jnp
from jax import lax
from jax.experimental import pallas as pl
from jax.experimental.pallas import tpu as pltpu

# ---------------- problem sizes (small, consistent with the module) ----------
CTX_DIM   = 768          # hardcoded ctx_dim in PromptLearner
EMBED_DIM = 512          # BiomedCLIP joint embedding dim
N_CTX     = 4            # context tokens
SEQ_LEN   = 16           # tokenized prompt length: 1 prefix + N_CTX + 11 suffix
N_CLS     = 4            # number of classes
BATCH     = 2
IMG_C, IMG_H, IMG_W = 3, 16, 16   # small synthetic image (real model uses 3x224x224)

VMEM_SPEC = pl.BlockSpec(memory_space=pltpu.MemorySpace.VMEM)


# ---------------- fused Pallas kernel -----------------------------------------
def _fused_clip_kernel(scale_ref,                         # SMEM scalar prefetch: (1,) f32
                       prefix_ref, ctx_ref, suffix_ref,   # prompt pieces (f32)
                       text_w_ref, text_b_ref,            # text projection (bf16 W, f32 b)
                       img_ref, img_w_ref, img_b_ref,     # image: flat pixels + projection
                       o_ref):                            # logits (B, N_CLS) f32
    # ---- text branch: mean-pool over the (virtual) concatenated prompt -------
    # Equivalent to mean(concat([prefix, ctx, suffix], token_axis), token_axis)
    # without materializing the (N_CLS, SEQ_LEN, CTX_DIM) concat in HBM.
    ctx_sum    = jnp.sum(ctx_ref[...], axis=0, keepdims=True)         # (1, CTX_DIM)
    suffix_sum = jnp.sum(suffix_ref[...], axis=1)                     # (N_CLS, CTX_DIM)
    pooled = (prefix_ref[...] + suffix_sum + ctx_sum) * (1.0 / SEQ_LEN)

    # ---- projections: bf16 operands on the MXU, f32 accumulation -------------
    text_features = jnp.dot(pooled.astype(jnp.bfloat16), text_w_ref[...],
                            preferred_element_type=jnp.float32) + text_b_ref[...]
    image_features = jnp.dot(img_ref[...].astype(jnp.bfloat16), img_w_ref[...],
                             preferred_element_type=jnp.float32) + img_b_ref[...]

    # ---- L2 normalization (f32, epsilon-guarded) ------------------------------
    img_n = image_features * lax.rsqrt(
        jnp.sum(image_features * image_features, axis=-1, keepdims=True) + 1e-12)
    txt_n = text_features * lax.rsqrt(
        jnp.sum(text_features * text_features, axis=-1, keepdims=True) + 1e-12)

    # ---- cosine logits: contract last axes of both operands (no transpose) ---
    scale = jnp.exp(scale_ref[0])
    sims = lax.dot_general(img_n.astype(jnp.bfloat16), txt_n.astype(jnp.bfloat16),
                           dimension_numbers=(((1,), (1,)), ((), ())),
                           preferred_element_type=jnp.float32)
    o_ref[...] = scale * sims


def fused_clip_forward(logit_scale, prefix2d, ctx, suffix,
                       text_w, text_b, img_flat, img_w, img_b):
    b = img_flat.shape[0]
    n_cls = prefix2d.shape[0]
    return pl.pallas_call(
        _fused_clip_kernel,
        out_shape=jax.ShapeDtypeStruct((b, n_cls), jnp.float32),
        grid_spec=pltpu.PrefetchScalarGridSpec(
            num_scalar_prefetch=1,          # logit_scale -> SMEM before the kernel runs
            grid=(),
            in_specs=[VMEM_SPEC] * 8,       # whole-array VMEM blocks (tiny toy sizes)
            out_specs=VMEM_SPEC,
        ),
    )(logit_scale, prefix2d, ctx, suffix, text_w, text_b, img_flat, img_w, img_b)


# ---------------- CustomCLIP wrapper (parameter setup / glue in plain JAX) ---
class CustomCLIPPallas:
    def __init__(self, key):
        ks = jax.random.split(key, 6)
        # PromptLearner: generic context (n_ctx, ctx_dim), std=0.02
        self.ctx = 0.02 * jax.random.normal(ks[0], (N_CTX, CTX_DIM), jnp.float32)
        # registered buffers: token_prefix (SOS) and token_suffix (class + EOS + pad)
        self.token_prefix = 0.02 * jax.random.normal(
            ks[1], (N_CLS, 1, CTX_DIM), jnp.float32)
        self.token_suffix = 0.02 * jax.random.normal(
            ks[2], (N_CLS, SEQ_LEN - 1 - N_CTX, CTX_DIM), jnp.float32)
        # surrogate text encoder projection (stored bf16 for the MXU / half DMA)
        self.text_w = (jax.random.normal(ks[3], (CTX_DIM, EMBED_DIM), jnp.float32)
                       / jnp.sqrt(jnp.float32(CTX_DIM))).astype(jnp.bfloat16)
        self.text_b = jnp.zeros((1, EMBED_DIM), jnp.float32)
        # surrogate image encoder projection (flattened NCHW -> embed), bf16 weights
        in_dim = IMG_C * IMG_H * IMG_W
        self.img_w = (jax.random.normal(ks[4], (in_dim, EMBED_DIM), jnp.float32)
                      / jnp.sqrt(jnp.float32(in_dim))).astype(jnp.bfloat16)
        self.img_b = jnp.zeros((1, EMBED_DIM), jnp.float32)
        # CLIP logit scale (log(1/0.07) as in BiomedCLIP); exp() taken in-kernel
        self.logit_scale = jnp.array([jnp.log(1.0 / 0.07)], jnp.float32)
        # prefix has a singleton token axis; drop it once (pure layout, no compute)
        self._prefix2d = self.token_prefix.reshape(N_CLS, CTX_DIM)

    def __call__(self, image):
        # flatten NCHW -> (B, C*H*W); everything else happens inside ONE kernel
        x = image.reshape(image.shape[0], -1)
        return fused_clip_forward(self.logit_scale, self._prefix2d, self.ctx,
                                  self.token_suffix, self.text_w, self.text_b,
                                  x, self.img_w, self.img_b)


# ---------------- demo --------------------------------------------------------
if __name__ == "__main__":
    key = jax.random.PRNGKey(0)
    k_img, k_params = jax.random.split(key)
    image = jax.random.normal(k_img, (BATCH, IMG_C, IMG_H, IMG_W), jnp.float32)

    model = CustomCLIPPallas(k_params)
    logits = model(image)
    jax.block_until_ready(logits)

    assert logits.shape == (BATCH, N_CLS)
    assert jnp.all(jnp.isfinite(logits))
    print("KERNEL_OK")
</pallas_src>

<mosaic_0001>
module attributes {stable_mosaic.version = 11 : i64} {
  func.func @_fused_clip_kernel(%arg0: memref<1xf32, #tpu.memory_space<smem>>, %arg1: memref<4x768xf32, #tpu.memory_space<vmem>>, %arg2: memref<4x768xf32, #tpu.memory_space<vmem>>, %arg3: memref<4x11x768xf32, #tpu.memory_space<vmem>>, %arg4: memref<768x512xbf16, #tpu.memory_space<vmem>>, %arg5: memref<1x512xf32, #tpu.memory_space<vmem>>, %arg6: memref<2x768xf32, #tpu.memory_space<vmem>>, %arg7: memref<768x512xbf16, #tpu.memory_space<vmem>>, %arg8: memref<1x512xf32, #tpu.memory_space<vmem>>, %arg9: memref<2x4xf32, #tpu.memory_space<vmem>>) attributes {dimension_semantics = [], scalar_prefetch = 1 : i64, scratch_operands = 0 : i64, tpu.core_type = #tpu.core_type<tc>} {
    %c0 = arith.constant 0 : index
    %c0_0 = arith.constant 0 : index
    %0 = vector.load %arg2[%c0, %c0_0] : memref<4x768xf32, #tpu.memory_space<vmem>>, vector<4x768xf32>
    %cst = arith.constant dense<0.000000e+00> : vector<768xf32>
    %1 = vector.multi_reduction <add>, %0, %cst [0] : vector<4x768xf32> to vector<768xf32>
    %2 = vector.shape_cast %1 : vector<768xf32> to vector<1x768xf32>
    %c0_1 = arith.constant 0 : index
    %c0_2 = arith.constant 0 : index
    %c0_3 = arith.constant 0 : index
    %3 = vector.load %arg3[%c0_1, %c0_2, %c0_3] : memref<4x11x768xf32, #tpu.memory_space<vmem>>, vector<4x11x768xf32>
    %cst_4 = arith.constant dense<0.000000e+00> : vector<4x768xf32>
    %4 = vector.multi_reduction <add>, %3, %cst_4 [1] : vector<4x11x768xf32> to vector<4x768xf32>
    %c0_5 = arith.constant 0 : index
    %c0_6 = arith.constant 0 : index
    %5 = vector.load %arg1[%c0_5, %c0_6] : memref<4x768xf32, #tpu.memory_space<vmem>>, vector<4x768xf32>
    %6 = arith.addf %5, %4 : vector<4x768xf32>
    %7 = vector.broadcast %2 : vector<1x768xf32> to vector<4x768xf32>
    %8 = arith.addf %6, %7 : vector<4x768xf32>
    %cst_7 = arith.constant 6.250000e-02 : f32
    %9 = vector.broadcast %cst_7 : f32 to vector<4x768xf32>
    %10 = arith.mulf %8, %9 : vector<4x768xf32>
    %11 = arith.truncf %10 : vector<4x768xf32> to vector<4x768xbf16>
    %c0_8 = arith.constant 0 : index
    %c0_9 = arith.constant 0 : index
    %12 = vector.load %arg4[%c0_8, %c0_9] : memref<768x512xbf16, #tpu.memory_space<vmem>>, vector<768x512xbf16>
    %cst_10 = arith.constant dense<0.000000e+00> : vector<4x512xf32>
    %13 = tpu.matmul %11, %12, %cst_10 {dimension_numbers = #tpu.dot_dimension_numbers<[1], [0], [0], [1], [0, 0, 1, 1], [], []>} : vector<4x768xbf16>, vector<768x512xbf16>, vector<4x512xf32> -> vector<4x512xf32>
    %c0_11 = arith.constant 0 : index
    %c0_12 = arith.constant 0 : index
    %14 = vector.load %arg5[%c0_11, %c0_12] : memref<1x512xf32, #tpu.memory_space<vmem>>, vector<1x512xf32>
    %15 = vector.broadcast %14 : vector<1x512xf32> to vector<4x512xf32>
    %16 = arith.addf %13, %15 : vector<4x512xf32>
    %c0_13 = arith.constant 0 : index
    %c0_14 = arith.constant 0 : index
    %17 = vector.load %arg6[%c0_13, %c0_14] : memref<2x768xf32, #tpu.memory_space<vmem>>, vector<2x768xf32>
    %18 = arith.truncf %17 : vector<2x768xf32> to vector<2x768xbf16>
    %c0_15 = arith.constant 0 : index
    %c0_16 = arith.constant 0 : index
    %19 = vector.load %arg7[%c0_15, %c0_16] : memref<768x512xbf16, #tpu.memory_space<vmem>>, vector<768x512xbf16>
    %cst_17 = arith.constant dense<0.000000e+00> : vector<2x512xf32>
    %20 = tpu.matmul %18, %19, %cst_17 {dimension_numbers = #tpu.dot_dimension_numbers<[1], [0], [0], [1], [0, 0, 1, 1], [], []>} : vector<2x768xbf16>, vector<768x512xbf16>, vector<2x512xf32> -> vector<2x512xf32>
    %c0_18 = arith.constant 0 : index
    %c0_19 = arith.constant 0 : index
    %21 = vector.load %arg8[%c0_18, %c0_19] : memref<1x512xf32, #tpu.memory_space<vmem>>, vector<1x512xf32>
    %22 = vector.broadcast %21 : vector<1x512xf32> to vector<2x512xf32>
    %23 = arith.addf %20, %22 : vector<2x512xf32>
    %24 = arith.mulf %23, %23 : vector<2x512xf32>
    %cst_20 = arith.constant dense<0.000000e+00> : vector<2xf32>
    %25 = vector.multi_reduction <add>, %24, %cst_20 [1] : vector<2x512xf32> to vector<2xf32>
    %26 = vector.shape_cast %25 : vector<2xf32> to vector<2x1xf32>
    %cst_21 = arith.constant 9.99999996E-13 : f32
    %27 = vector.broadcast %cst_21 : f32 to vector<2x1xf32>
    %28 = arith.addf %26, %27 : vector<2x1xf32>
    %29 = math.rsqrt %28 : vector<2x1xf32>
    %30 = vector.broadcast %29 : vector<2x1xf32> to vector<2x512xf32>
    %31 = arith.mulf %23, %30 : vector<2x512xf32>
    %32 = arith.mulf %16, %16 : vector<4x512xf32>
    %cst_22 = arith.constant dense<0.000000e+00> : vector<4xf32>
    %33 = vector.multi_reduction <add>, %32, %cst_22 [1] : vector<4x512xf32> to vector<4xf32>
    %34 = vector.shape_cast %33 : vector<4xf32> to vector<4x1xf32>
    %cst_23 = arith.constant 9.99999996E-13 : f32
    %35 = vector.broadcast %cst_23 : f32 to vector<4x1xf32>
    %36 = arith.addf %34, %35 : vector<4x1xf32>
    %37 = math.rsqrt %36 : vector<4x1xf32>
    %38 = vector.broadcast %37 : vector<4x1xf32> to vector<4x512xf32>
    %39 = arith.mulf %16, %38 : vector<4x512xf32>
    %c0_24 = arith.constant 0 : index
    %40 = memref.load %arg0[%c0_24] : memref<1xf32, #tpu.memory_space<smem>>
    %41 = math.exp %40 : f32
    %42 = arith.truncf %31 : vector<2x512xf32> to vector<2x512xbf16>
    %43 = arith.truncf %39 : vector<4x512xf32> to vector<4x512xbf16>
    %cst_25 = arith.constant dense<0.000000e+00> : vector<2x4xf32>
    %44 = tpu.matmul %42, %43, %cst_25 {dimension_numbers = #tpu.dot_dimension_numbers<[1], [1], [0], [0], [0, 0, 1, 0], [], []>} : vector<2x512xbf16>, vector<4x512xbf16>, vector<2x4xf32> -> vector<2x4xf32>
    %45 = vector.broadcast %41 : f32 to vector<2x4xf32>
    %46 = arith.mulf %45, %44 : vector<2x4xf32>
    %c0_26 = arith.constant 0 : index
    %c0_27 = arith.constant 0 : index
    %47 = vector.load %arg9[%c0_26, %c0_27] : memref<2x4xf32, #tpu.memory_space<vmem>>, vector<2x4xf32>
    tpu.vector_store %arg9[%c0_26, %c0_27], %46 {strides = array<i32>} : memref<2x4xf32, #tpu.memory_space<vmem>>, vector<2x4xf32>,
    return
  }
}

</mosaic_0001>

<llo_original>
// kernel: tpu_custom_call.1
$region0: #{tpu_custom_call.1}
  #allocation0 [shape = 'u32[]', space=smem, size = 0x4, offset = 0x4, fixed_abs, tag = 'smem constant byte address 0x4 - core index']
  #allocation1 [shape = 'u32[144,128]{1,0:T(1,128)}', space=vmem, size = 0x12000, scoped, tag = 'internal scratch']
  #allocation2 [shape = 's32[1]{0}', space=sflag, size = 0x4, scoped, tag = 'scoped memory for tpu_custom_call.1']
  #allocation3 [shape = 'f32[1]{0:T(128)S(6)}', space=smem, size = 0x200, scoped, tag = 'prefetched SMEM operand 0']
  %s0 = inlined_call_operand.<no memory space> [shape: f32[1], index: 0, kind: input, shape index: {}]
  %s1 = inlined_call_operand.vmem [shape: f32[4,768], index: 1, kind: input, shape index: {}]
  %s2 = inlined_call_operand.vmem [shape: f32[4,768], index: 2, kind: input, shape index: {}]
  %s3 = inlined_call_operand.vmem [shape: f32[4,11,768], index: 3, kind: input, shape index: {}]
  %s4 = inlined_call_operand.hbm [shape: bf16[768,512], index: 4, kind: input, shape index: {}]
  %s5 = inlined_call_operand.vmem [shape: f32[1,512], index: 5, kind: input, shape index: {}]
  %s6 = inlined_call_operand.vmem [shape: f32[2,768], index: 6, kind: input, shape index: {}]
  %s7 = inlined_call_operand.hbm [shape: bf16[768,512], index: 7, kind: input, shape index: {}]
  %s8 = inlined_call_operand.vmem [shape: f32[1,512], index: 8, kind: input, shape index: {}]
  %s9 = inlined_call_operand.hbm [shape: f32[2,4], index: 9, kind: output, shape index: {}]
  %s10 = sld [smem:[#allocation0]]
  $region50: #{tpu_custom_call.1} parent=0
    _
  %s12 = ssub.s32 1, %s10
  %s13 = scalar_select 0, %s12, %s10
  %14 = sst [smem:[#allocation3]] %s0
  $region1: #{tpu_custom_call.1} parent=0
    #allocation4 [shape = 'u8[786432]{0}', space=vmem, size = 0xc0000, scoped, tag = 'input window, operand 4, single buffered']
    #allocation5 [shape = 's32[1]{0}', space=sflag, size = 0x4, scoped, tag = 'scoped memory for tpu_custom_call.1']
    #allocation6 [shape = 's32[1]{0}', space=sflag, size = 0x4, scoped, tag = 'scoped memory for tpu_custom_call.1']
    #allocation7 [shape = 'u8[786432]{0}', space=vmem, size = 0xc0000, scoped, tag = 'input window, operand 7, single buffered']
    #allocation8 [shape = 's32[1]{0}', space=sflag, size = 0x4, scoped, tag = 'scoped memory for tpu_custom_call.1']
    #allocation9 [shape = 'u8[1024]{0}', space=vmem, size = 0x400, scoped, tag = 'output window, operand 0, single buffered']
    %15 = vsyncpa [#allocation5], 0
    %16 = vsyncpa [#allocation8], 0
    %17 = vsyncpa [#allocation6], 0
    // Predicated region
    $region2: #{tpu_custom_call.1} parent=1 // pred_check
      _
    $region3: #{tpu_custom_call.1} parent=1 // pred_check_branch
      %19 = sbr.rel (0) target = $region5
    $region4: #{tpu_custom_call.1} parent=1 // pred_region
      _
    $region5: #{tpu_custom_call.1} parent=1 // pred_fallthru
      _
    // Predicated region
    $region6: #{tpu_custom_call.1} parent=1 // pred_check
      _
    $region7: #{tpu_custom_call.1} parent=1 // pred_check_branch
      %21 = sbr.rel (0) target = $region9
    $region8: #{tpu_custom_call.1} parent=1 // pred_region
      _
    $region9: #{tpu_custom_call.1} parent=1 // pred_fallthru
      _
    // Predicated region
    $region10: #{tpu_custom_call.1} parent=1 // pred_check
      _
    $region11: #{tpu_custom_call.1} parent=1 // pred_check_branch
      %23 = sbr.rel (0) target = $region13
    $region12: #{tpu_custom_call.1} parent=1 // pred_region
      _
    $region13: #{tpu_custom_call.1} parent=1 // pred_fallthru
      _
    // Predicated region
    $region14: #{tpu_custom_call.1} parent=1 // pred_check
      _
    $region15: #{tpu_custom_call.1} parent=1 // pred_check_branch
      %25 = sbr.rel (0) target = $region17
    $region16: #{tpu_custom_call.1} parent=1 // pred_region
      %s27 = ssub.s32 24576, 24576
      %28 = vsyncadd [#allocation5], %s27
      %s29 = sshll.u32 [#allocation4], 4
      %s30 = int_to_ptr.vmem [resolvable:$true] %s29
      %35 = dma.hbm_to_vmem [thread:$0]  %s4, 24576, %s30, [#allocation5], 256, 256, 16
    $region17: #{tpu_custom_call.1} parent=1 // pred_fallthru
      _
    // Predicated region
    $region18: #{tpu_custom_call.1} parent=1 // pred_check
      _
    $region19: #{tpu_custom_call.1} parent=1 // pred_check_branch
      %37 = sbr.rel (0) target = $region21
    $region20: #{tpu_custom_call.1} parent=1 // pred_region
      _
    $region21: #{tpu_custom_call.1} parent=1 // pred_fallthru
      _
    // Predicated region
    $region22: #{tpu_custom_call.1} parent=1 // pred_check
      _
    $region23: #{tpu_custom_call.1} parent=1 // pred_check_branch
      %39 = sbr.rel (0) target = $region25
    $region24: #{tpu_custom_call.1} parent=1 // pred_region
      _
    $region25: #{tpu_custom_call.1} parent=1 // pred_fallthru
      _
    // Predicated region
    $region26: #{tpu_custom_call.1} parent=1 // pred_check
      _
    $region27: #{tpu_custom_call.1} parent=1 // pred_check_branch
      %41 = sbr.rel (0) target = $region29
    $region28: #{tpu_custom_call.1} parent=1 // pred_region
      %s43 = ssub.s32 24576, 24576
      %44 = vsyncadd [#allocation8], %s43
      %s45 = sshll.u32 [#allocation7], 4
      %s46 = int_to_ptr.vmem [resolvable:$true] %s45
      %51 = dma.hbm_to_vmem [thread:$0]  %s7, 24576, %s46, [#allocation8], 256, 256, 16
    $region29: #{tpu_custom_call.1} parent=1 // pred_fallthru
      _
    // Predicated region
    $region30: #{tpu_custom_call.1} parent=1 // pred_check
      _
    $region31: #{tpu_custom_call.1} parent=1 // pred_check_branch
      %53 = sbr.rel (0) target = $region33
    $region32: #{tpu_custom_call.1} parent=1 // pred_region
      _
    $region33: #{tpu_custom_call.1} parent=1 // pred_fallthru
      _
    // Predicated region
    $region34: #{tpu_custom_call.1} parent=1 // pred_check
      _
    $region35: #{tpu_custom_call.1} parent=1 // pred_check_branch
      %55 = sbr.rel (0) target = $region37
    $region36: #{tpu_custom_call.1} parent=1 // pred_region
      %56 = dma.done [#allocation5], 24576
    $region37: #{tpu_custom_call.1} parent=1 // pred_fallthru
      _
    // Predicated region
    $region38: #{tpu_custom_call.1} parent=1 // pred_check
      _
    $region39: #{tpu_custom_call.1} parent=1 // pred_check_branch
      %58 = sbr.rel (0) target = $region41
    $region40: #{tpu_custom_call.1} parent=1 // pred_region
      %59 = dma.done [#allocation8], 24576
    $region41: #{tpu_custom_call.1} parent=1 // pred_fallthru
      _
    %v61 = vld [vmem:[%s2] sm:$0xff]
    %v62 = vld [vmem:[%s2 + $0x8] sm:$0xff]
    %v63 = vld [vmem:[%s2 + $0x10] sm:$0xff]
    %v67 = vcombine.high %v61, %v61
    %v68 = vcombine.high %v62, %v62
    %v69 = vcombine.high %v63, %v63
    %vm73 = vcmask 1043456
    %v74 = vsel %vm73, %v61, 0.0
    %v75 = vrot.slane %v74, 4
    %v76 = vadd.f32 %v74, %v75
    %v77 = vrot.slane %v76, 2
    %v78 = vadd.f32 %v76, %v77
    %v79 = vrot.slane %v78, 1
    %v80 = vadd.f32 %v78, %v79
    %v81 = vsel %vm73, %v67, 0.0
    %v82 = vrot.slane %v81, 4
    %v83 = vadd.f32 %v81, %v82
    %v84 = vrot.slane %v83, 2
    %v85 = vadd.f32 %v83, %v84
    %v86 = vrot.slane %v85, 1
    %v87 = vadd.f32 %v85, %v86
    %v88 = vsel %vm73, %v62, 0.0
    %v89 = vrot.slane %v88, 4
    %v90 = vadd.f32 %v88, %v89
    %v91 = vrot.slane %v90, 2
    %v92 = vadd.f32 %v90, %v91
    %v93 = vrot.slane %v92, 1
    %v94 = vadd.f32 %v92, %v93
    %v95 = vsel %vm73, %v68, 0.0
    %v96 = vrot.slane %v95, 4
    %v97 = vadd.f32 %v95, %v96
    %v98 = vrot.slane %v97, 2
    %v99 = vadd.f32 %v97, %v98
    %v100 = vrot.slane %v99, 1
    %v101 = vadd.f32 %v99, %v100
    %v102 = vsel %vm73, %v63, 0.0
    %v103 = vrot.slane %v102, 4
    %v104 = vadd.f32 %v102, %v103
    %v105 = vrot.slane %v104, 2
    %v106 = vadd.f32 %v104, %v105
    %v107 = vrot.slane %v106, 1
    %v108 = vadd.f32 %v106, %v107
    %v109 = vsel %vm73, %v69, 0.0
    %v110 = vrot.slane %v109, 4
    %v111 = vadd.f32 %v109, %v110
    %v112 = vrot.slane %v111, 2
    %v113 = vadd.f32 %v111, %v112
    %v114 = vrot.slane %v113, 1
    %v115 = vadd.f32 %v113, %v114
    %v116 = vld [vmem:[%s3] sm:$0xff]
    %v117 = vld [vmem:[%s3 + $0x8] sm:$0xff]
    %v118 = vld [vmem:[%s3 + $0x10] sm:$0xff]
    %v119 = vld [vmem:[%s3 + $0x18] sm:$0xff]
    %v120 = vld [vmem:[%s3 + $0x20] sm:$0xff]
    %v121 = vld [vmem:[%s3 + $0x28] sm:$0xff]
    %v122 = vld [vmem:[%s3 + $0x30] sm:$0x7]
    %v123 = vld [vmem:[%s3 + $0x38] sm:$0x7]
    %v124 = vld [vmem:[%s3 + $0x40] sm:$0x7]
    %v125 = vld [vmem:[%s3 + $0x48] sm:$0x7]
    %v126 = vld [vmem:[%s3 + $0x50] sm:$0x7]
    %v127 = vld [vmem:[%s3 + $0x58] sm:$0x7]
    %v128 = vld [vmem:[%s3 + $0x60] sm:$0xff]
    %v129 = vld [vmem:[%s3 + $0x68] sm:$0xff]
    %v130 = vld [vmem:[%s3 + $0x70] sm:$0xff]
    %v131 = vld [vmem:[%s3 + $0x78] sm:$0xff]
    %v132 = vld [vmem:[%s3 + $0x80] sm:$0xff]
    %v133 = vld [vmem:[%s3 + $0x88] sm:$0xff]
    %v134 = vld [vmem:[%s3 + $0x90] sm:$0x7]
    %v135 = vld [vmem:[%s3 + $0x98] sm:$0x7]
    %v136 = vld [vmem:[%s3 + $0xa0] sm:$0x7]
    %v137 = vld [vmem:[%s3 + $0xa8] sm:$0x7]
    %v138 = vld [vmem:[%s3 + $0xb0] sm:$0x7]
    %v139 = vld [vmem:[%s3 + $0xb8] sm:$0x7]
    %v140 = vld [vmem:[%s3 + $0xc0] sm:$0xff]
    %v141 = vld [vmem:[%s3 + $0xc8] sm:$0xff]
    %v142 = vld [vmem:[%s3 + $0xd0] sm:$0xff]
    %v143 = vld [vmem:[%s3 + $0xd8] sm:$0xff]
    %v144 = vld [vmem:[%s3 + $0xe0] sm:$0xff]
    %v145 = vld [vmem:[%s3 + $0xe8] sm:$0xff]
    %v146 = vld [vmem:[%s3 + $0xf0] sm:$0x7]
    %v147 = vld [vmem:[%s3 + $0xf8] sm:$0x7]
    %v148 = vld [vmem:[%s3 + $0x100] sm:$0x7]
    %v149 = vld [vmem:[%s3 + $0x108] sm:$0x7]
    %v150 = vld [vmem:[%s3 + $0x110] sm:$0x7]
    %v151 = vld [vmem:[%s3 + $0x118] sm:$0x7]
    %v152 = vld [vmem:[%s3 + $0x120] sm:$0xff]
    %v153 = vld [vmem:[%s3 + $0x128] sm:$0xff]
    %v154 = vld [vmem:[%s3 + $0x130] sm:$0xff]
    %v155 = vld [vmem:[%s3 + $0x138] sm:$0xff]
    %v156 = vld [vmem:[%s3 + $0x140] sm:$0xff]
    %v157 = vld [vmem:[%s3 + $0x148] sm:$0xff]
    %v158 = vld [vmem:[%s3 + $0x150] sm:$0x7]
    %v159 = vld [vmem:[%s3 + $0x158] sm:$0x7]
    %v160 = vld [vmem:[%s3 + $0x160] sm:$0x7]
    %v161 = vld [vmem:[%s3 + $0x168] sm:$0x7]
    %v162 = vld [vmem:[%s3 + $0x170] sm:$0x7]
    %v163 = vld [vmem:[%s3 + $0x178] sm:$0x7]
    %vm164 = vcmask 1042432
    %v165 = vsel %vm164, %v122, 0.0
    %v166 = vadd.f32 %v116, %v165
    %v167 = vrot.slane %v166, 4
    %v168 = vadd.f32 %v166, %v167
    %v169 = vrot.slane %v168, 2
    %v170 = vadd.f32 %v168, %v169
    %v171 = vrot.slane %v170, 1
    %v172 = vadd.f32 %v170, %v171
    %v173 = vsel %vm164, %v123, 0.0
    %v174 = vadd.f32 %v117, %v173
    %v175 = vrot.slane %v174, 4
    %v176 = vadd.f32 %v174, %v175
    %v177 = vrot.slane %v176, 2
    %v178 = vadd.f32 %v176, %v177
    %v179 = vrot.slane %v178, 1
    %v180 = vadd.f32 %v178, %v179
    %v181 = vsel %vm164, %v124, 0.0
    %v182 = vadd.f32 %v118, %v181
    %v183 = vrot.slane %v182, 4
    %v184 = vadd.f32 %v182, %v183
    %v185 = vrot.slane %v184, 2
    %v186 = vadd.f32 %v184, %v185
    %v187 = vrot.slane %v186, 1
    %v188 = vadd.f32 %v186, %v187
    %v189 = vsel %vm164, %v125, 0.0
    %v190 = vadd.f32 %v119, %v189
    %v191 = vrot.slane %v190, 4
    %v192 = vadd.f32 %v190, %v191
    %v193 = vrot.slane %v192, 2
    %v194 = vadd.f32 %v192, %v193
    %v195 = vrot.slane %v194, 1
    %v196 = vadd.f32 %v194, %v195
    %v197 = vsel %vm164, %v126, 0.0
    %v198 = vadd.f32 %v120, %v197
    %v199 = vrot.slane %v198, 4
    %v200 = vadd.f32 %v198, %v199
    %v201 = vrot.slane %v200, 2
    %v202 = vadd.f32 %v200, %v201
    %v203 = vrot.slane %v202, 1
    %v204 = vadd.f32 %v202, %v203
    %v205 = vsel %vm164, %v127, 0.0
    %v206 = vadd.f32 %v121, %v205
    %v207 = vrot.slane %v206, 4
    %v208 = vadd.f32 %v206, %v207
    %v209 = vrot.slane %v208, 2
    %v210 = vadd.f32 %v208, %v209
    %v211 = vrot.slane %v210, 1
    %v212 = vadd.f32 %v210, %v211
    %v213 = vsel %vm164, %v134, 0.0
    %v214 = vadd.f32 %v128, %v213
    %v215 = vrot.slane %v214, 4
    %v216 = vadd.f32 %v214, %v215
    %v217 = vrot.slane %v216, 2
    %v218 = vadd.f32 %v216, %v217
    %v219 = vrot.slane %v218, 1
    %v220 = vadd.f32 %v218, %v219
    %v221 = vsel %vm164, %v135, 0.0
    %v222 = vadd.f32 %v129, %v221
    %v223 = vrot.slane %v222, 4
    %v224 = vadd.f32 %v222, %v223
    %v225 = vrot.slane %v224, 2
    %v226 = vadd.f32 %v224, %v225
    %v227 = vrot.slane %v226, 1
    %v228 = vadd.f32 %v226, %v227
    %v229 = vsel %vm164, %v136, 0.0
    %v230 = vadd.f32 %v130, %v229
    %v231 = vrot.slane %v230, 4
    %v232 = vadd.f32 %v230, %v231
    %v233 = vrot.slane %v232, 2
    %v234 = vadd.f32 %v232, %v233
    %v235 = vrot.slane %v234, 1
    %v236 = vadd.f32 %v234, %v235
    %v237 = vsel %vm164, %v137, 0.0
    %v238 = vadd.f32 %v131, %v237
    %v239 = vrot.slane %v238, 4
    %v240 = vadd.f32 %v238, %v239
    %v241 = vrot.slane %v240, 2
    %v242 = vadd.f32 %v240, %v241
    %v243 = vrot.slane %v242, 1
    %v244 = vadd.f32 %v242, %v243
    %v245 = vsel %vm164, %v138, 0.0
    %v246 = vadd.f32 %v132, %v245
    %v247 = vrot.slane %v246, 4
    %v248 = vadd.f32 %v246, %v247
    %v249 = vrot.slane %v248, 2
    %v250 = vadd.f32 %v248, %v249
    %v251 = vrot.slane %v250, 1
    %v252 = vadd.f32 %v250, %v251
    %v253 = vsel %vm164, %v139, 0.0
    %v254 = vadd.f32 %v133, %v253
    %v255 = vrot.slane %v254, 4
    %v256 = vadd.f32 %v254, %v255
    %v257 = vrot.slane %v256, 2
    %v258 = vadd.f32 %v256, %v257
    %v259 = vrot.slane %v258, 1
    %v260 = vadd.f32 %v258, %v259
    %v261 = vsel %vm164, %v146, 0.0
    %v262 = vadd.f32 %v140, %v261
    %v263 = vrot.slane %v262, 4
    %v264 = vadd.f32 %v262, %v263
    %v265 = vrot.slane %v264, 2
    %v266 = vadd.f32 %v264, %v265
    %v267 = vrot.slane %v266, 1
    %v268 = vadd.f32 %v266, %v267
    %v269 = vsel %vm164, %v147, 0.0
    %v270 = vadd.f32 %v141, %v269
    %v271 = vrot.slane %v270, 4
    %v272 = vadd.f32 %v270, %v271
    %v273 = vrot.slane %v272, 2
    %v274 = vadd.f32 %v272, %v273
    %v275 = vrot.slane %v274, 1
    %v276 = vadd.f32 %v274, %v275
    %v277 = vsel %vm164, %v148, 0.0
    %v278 = vadd.f32 %v142, %v277
    %v279 = vrot.slane %v278, 4
    %v280 = vadd.f32 %v278, %v279
    %v281 = vrot.slane %v280, 2
    %v282 = vadd.f32 %v280, %v281
    %v283 = vrot.slane %v282, 1
    %v284 = vadd.f32 %v282, %v283
    %v285 = vsel %vm164, %v149, 0.0
    %v286 = vadd.f32 %v143, %v285
    %v287 = vrot.slane %v286, 4
    %v288 = vadd.f32 %v286, %v287
    %v289 = vrot.slane %v288, 2
    %v290 = vadd.f32 %v288, %v289
    %v291 = vrot.slane %v290, 1
    %v292 = vadd.f32 %v290, %v291
    %v293 = vsel %vm164, %v150, 0.0
    %v294 = vadd.f32 %v144, %v293
    %v295 = vrot.slane %v294, 4
    %v296 = vadd.f32 %v294, %v295
    %v297 = vrot.slane %v296, 2
    %v298 = vadd.f32 %v296, %v297
    %v299 = vrot.slane %v298, 1
    %v300 = vadd.f32 %v298, %v299
    %v301 = vsel %vm164, %v151, 0.0
    %v302 = vadd.f32 %v145, %v301
    %v303 = vrot.slane %v302, 4
    %v304 = vadd.f32 %v302, %v303
    %v305 = vrot.slane %v304, 2
    %v306 = vadd.f32 %v304, %v305
    %v307 = vrot.slane %v306, 1
    %v308 = vadd.f32 %v306, %v307
    %v309 = vsel %vm164, %v158, 0.0
    %v310 = vadd.f32 %v152, %v309
    %v311 = vrot.slane %v310, 4
    %v312 = vadd.f32 %v310, %v311
    %v313 = vrot.slane %v312, 2
    %v314 = vadd.f32 %v312, %v313
    %v315 = vrot.slane %v314, 1
    %v316 = vadd.f32 %v314, %v315
    %v317 = vsel %vm164, %v159, 0.0
    %v318 = vadd.f32 %v153, %v317
    %v319 = vrot.slane %v318, 4
    %v320 = vadd.f32 %v318, %v319
    %v321 = vrot.slane %v320, 2
    %v322 = vadd.f32 %v320, %v321
    %v323 = vrot.slane %v322, 1
    %v324 = vadd.f32 %v322, %v323
    %v325 = vsel %vm164, %v160, 0.0
    %v326 = vadd.f32 %v154, %v325
    %v327 = vrot.slane %v326, 4
    %v328 = vadd.f32 %v326, %v327
    %v329 = vrot.slane %v328, 2
    %v330 = vadd.f32 %v328, %v329
    %v331 = vrot.slane %v330, 1
    %v332 = vadd.f32 %v330, %v331
    %v333 = vsel %vm164, %v161, 0.0
    %v334 = vadd.f32 %v155, %v333
    %v335 = vrot.slane %v334, 4
    %v336 = vadd.f32 %v334, %v335
    %v337 = vrot.slane %v336, 2
    %v338 = vadd.f32 %v336, %v337
    %v339 = vrot.slane %v338, 1
    %v340 = vadd.f32 %v338, %v339
    %v341 = vsel %vm164, %v162, 0.0
    %v342 = vadd.f32 %v156, %v341
    %v343 = vrot.slane %v342, 4
    %v344 = vadd.f32 %v342, %v343
    %v345 = vrot.slane %v344, 2
    %v346 = vadd.f32 %v344, %v345
    %v347 = vrot.slane %v346, 1
    %v348 = vadd.f32 %v346, %v347
    %v349 = vsel %vm164, %v163, 0.0
    %v350 = vadd.f32 %v157, %v349
    %v351 = vrot.slane %v350, 4
    %v352 = vadd.f32 %v350, %v351
    %v353 = vrot.slane %v352, 2
    %v354 = vadd.f32 %v352, %v353
    %v355 = vrot.slane %v354, 1
    %v356 = vadd.f32 %v354, %v355
    %v357 = vld [vmem:[%s1] sm:$0xff]
    %v358 = vld [vmem:[%s1 + $0x8] sm:$0xff]
    %v359 = vld [vmem:[%s1 + $0x10] sm:$0xff]
    %v384 = vcombine.low %v172, %v180
    %v385 = vcombine.low %v188, %v196
    %v386 = vcombine.low %v204, %v212
    %v387 = vcombine.low %v220, %v228
    %v388 = vcombine.low %v236, %v244
    %v389 = vcombine.low %v252, %v260
    %v390 = vcombine.low %v268, %v276
    %v391 = vcombine.low %v284, %v292
    %v392 = vcombine.low %v300, %v308
    %v393 = vcombine.low %v316, %v324
    %v394 = vcombine.low %v332, %v340
    %v395 = vcombine.low %v348, %v356
    %v396 = vrot.slane %v387, 7
    %vm397 = vcmask 1041409
    %v398 = vsel %vm397, %v396, %v384
    %vm399 = vcmask 1045509
    %v400 = vsel %vm399, %v396, %v398
    %v401 = vrot.slane %v390, 6
    %vm402 = vcmask 1042434
    %v403 = vsel %vm402, %v401, %v400
    %vm404 = vcmask 1046534
    %v405 = vsel %vm404, %v401, %v403
    %v406 = vrot.slane %v393, 5
    %vm407 = vcmask 1043459
    %v408 = vsel %vm407, %v406, %v405
    %vm409 = vcmask 1047559
    %v410 = vsel %vm409, %v406, %v408
    %v411 = vrot.slane %v388, 7
    %v412 = vsel %vm397, %v411, %v385
    %v413 = vsel %vm399, %v411, %v412
    %v414 = vrot.slane %v391, 6
    %v415 = vsel %vm402, %v414, %v413
    %v416 = vsel %vm404, %v414, %v415
    %v417 = vrot.slane %v394, 5
    %v418 = vsel %vm407, %v417, %v416
    %v419 = vsel %vm409, %v417, %v418
    %v420 = vrot.slane %v389, 7
    %v421 = vsel %vm397, %v420, %v386
    %v422 = vsel %vm399, %v420, %v421
    %v423 = vrot.slane %v392, 6
    %v424 = vsel %vm402, %v423, %v422
    %v425 = vsel %vm404, %v423, %v424
    %v426 = vrot.slane %v395, 5
    %v427 = vsel %vm407, %v426, %v425
    %v428 = vsel %vm409, %v426, %v427
    %v432 = vadd.f32 %v357, %v410
    %v433 = vadd.f32 %v358, %v419
    %v434 = vadd.f32 %v359, %v428
    %v441 = vcombine.low %v80, %v87
    %v442 = vcombine.low %v94, %v101
    %v443 = vcombine.low %v108, %v115
    %v447 = vadd.f32 %v432, %v441
    %v448 = vadd.f32 %v433, %v442
    %v449 = vadd.f32 %v434, %v443
    %v450 = vmul.f32 %v447, 0.0625
    %v451 = vmul.f32 %v448, 0.0625
    %v452 = vmul.f32 %v449, 0.0625
    %v456 = vcombine.high %v450, %v450
    %v457 = vcombine.high %v451, %v451
    %v458 = vcombine.high %v452, %v452
    %v462 = vpack.c.bf16 %v450, %v450
    %v463 = vpack.c.bf16 %v456, %v456
    %v464 = vpack.c.bf16 %v451, %v451
    %v465 = vpack.c.bf16 %v457, %v457
    %v466 = vpack.c.bf16 %v452, %v452
    %v467 = vpack.c.bf16 %v458, %v458
    %v468 = vld [vmem:[#allocation4] sm:$0xff]
    %v469 = vld [vmem:[#allocation4 + $0x8] sm:$0xff]
    %v470 = vld [vmem:[#allocation4 + $0x10] sm:$0xff]
    %v471 = vld [vmem:[#allocation4 + $0x18] sm:$0xff]
    %v472 = vld [vmem:[#allocation4 + $0x20] sm:$0xff]
    %v473 = vld [vmem:[#allocation4 + $0x28] sm:$0xff]
    %v474 = vld [vmem:[#allocation4 + $0x30] sm:$0xff]
    %v475 = vld [vmem:[#allocation4 + $0x38] sm:$0xff]
    %v476 = vld [vmem:[#allocation4 + $0x40] sm:$0xff]
    %v477 = vld [vmem:[#allocation4 + $0x48] sm:$0xff]
    %v478 = vld [vmem:[#allocation4 + $0x50] sm:$0xff]
    %v479 = vld [vmem:[#allocation4 + $0x58] sm:$0xff]
    %v480 = vld [vmem:[#allocation4 + $0x60] sm:$0xff]
    %v481 = vld [vmem:[#allocation4 + $0x68] sm:$0xff]
    %v482 = vld [vmem:[#allocation4 + $0x70] sm:$0xff]
    %v483 = vld [vmem:[#allocation4 + $0x78] sm:$0xff]
    %v484 = vld [vmem:[#allocation4 + $0x80] sm:$0xff]
    %v485 = vld [vmem:[#allocation4 + $0x88] sm:$0xff]
    %v486 = vld [vmem:[#allocation4 + $0x90] sm:$0xff]
    %v487 = vld [vmem:[#allocation4 + $0x98] sm:$0xff]
    %v488 = vld [vmem:[#allocation4 + $0xa0] sm:$0xff]
    %v489 = vld [vmem:[#allocation4 + $0xa8] sm:$0xff]
    %v490 = vld [vmem:[#allocation4 + $0xb0] sm:$0xff]
    %v491 = vld [vmem:[#allocation4 + $0xb8] sm:$0xff]
    %v492 = vld [vmem:[#allocation4 + $0xc0] sm:$0xff]
    %v493 = vld [vmem:[#allocation4 + $0xc8] sm:$0xff]
    %v494 = vld [vmem:[#allocation4 + $0xd0] sm:$0xff]
    %v495 = vld [vmem:[#allocation4 + $0xd8] sm:$0xff]
    %v496 = vld [vmem:[#allocation4 + $0xe0] sm:$0xff]
    %v497 = vld [vmem:[#allocation4 + $0xe8] sm:$0xff]
    %v498 = vld [vmem:[#allocation4 + $0xf0] sm:$0xff]
    %v499 = vld [vmem:[#allocation4 + $0xf8] sm:$0xff]
    %v500 = vld [vmem:[#allocation4 + $0x100] sm:$0xff]
    %v501 = vld [vmem:[#allocation4 + $0x108] sm:$0xff]
    %v502 = vld [vmem:[#allocation4 + $0x110] sm:$0xff]
    %v503 = vld [vmem:[#allocation4 + $0x118] sm:$0xff]
    %v504 = vld [vmem:[#allocation4 + $0x120] sm:$0xff]
    %v505 = vld [vmem:[#allocation4 + $0x128] sm:$0xff]
    %v506 = vld [vmem:[#allocation4 + $0x130] sm:$0xff]
    %v507 = vld [vmem:[#allocation4 + $0x138] sm:$0xff]
    %v508 = vld [vmem:[#allocation4 + $0x140] sm:$0xff]
    %v509 = vld [vmem:[#allocation4 + $0x148] sm:$0xff]
    %v510 = vld [vmem:[#allocation4 + $0x150] sm:$0xff]
    %v511 = vld [vmem:[#allocation4 + $0x158] sm:$0xff]
    %v512 = vld [vmem:[#allocation4 + $0x160] sm:$0xff]
    %v513 = vld [vmem:[#allocation4 + $0x168] sm:$0xff]
    %v514 = vld [vmem:[#allocation4 + $0x170] sm:$0xff]
    %v515 = vld [vmem:[#allocation4 + $0x178] sm:$0xff]
    %v516 = vld [vmem:[#allocation4 + $0x180] sm:$0xff]
    %v517 = vld [vmem:[#allocation4 + $0x188] sm:$0xff]
    %v518 = vld [vmem:[#allocation4 + $0x190] sm:$0xff]
    %v519 = vld [vmem:[#allocation4 + $0x198] sm:$0xff]
    %v520 = vld [vmem:[#allocation4 + $0x1a0] sm:$0xff]
    %v521 = vld [vmem:[#allocation4 + $0x1a8] sm:$0xff]
    %v522 = vld [vmem:[#allocation4 + $0x1b0] sm:$0xff]
    %v523 = vld [vmem:[#allocation4 + $0x1b8] sm:$0xff]
    %v524 = vld [vmem:[#allocation4 + $0x1c0] sm:$0xff]
    %v525 = vld [vmem:[#allocation4 + $0x1c8] sm:$0xff]
    %v526 = vld [vmem:[#allocation4 + $0x1d0] sm:$0xff]
    %v527 = vld [vmem:[#allocation4 + $0x1d8] sm:$0xff]
    %v528 = vld [vmem:[#allocation4 + $0x1e0] sm:$0xff]
    %v529 = vld [vmem:[#allocation4 + $0x1e8] sm:$0xff]
    %v530 = vld [vmem:[#allocation4 + $0x1f0] sm:$0xff]
    %v531 = vld [vmem:[#allocation4 + $0x1f8] sm:$0xff]
    %v532 = vld [vmem:[#allocation4 + $0x200] sm:$0xff]
    %v533 = vld [vmem:[#allocation4 + $0x208] sm:$0xff]
    %v534 = vld [vmem:[#allocation4 + $0x210] sm:$0xff]
    %v535 = vld [vmem:[#allocation4 + $0x218] sm:$0xff]
    %v536 = vld [vmem:[#allocation4 + $0x220] sm:$0xff]
    %v537 = vld [vmem:[#allocation4 + $0x228] sm:$0xff]
    %v538 = vld [vmem:[#allocation4 + $0x230] sm:$0xff]
    %v539 = vld [vmem:[#allocation4 + $0x238] sm:$0xff]
    %v540 = vld [vmem:[#allocation4 + $0x240] sm:$0xff]
    %v541 = vld [vmem:[#allocation4 + $0x248] sm:$0xff]
    %v542 = vld [vmem:[#allocation4 + $0x250] sm:$0xff]
    %v543 = vld [vmem:[#allocation4 + $0x258] sm:$0xff]
    %v544 = vld [vmem:[#allocation4 + $0x260] sm:$0xff]
    %v545 = vld [vmem:[#allocation4 + $0x268] sm:$0xff]
    %v546 = vld [vmem:[#allocation4 + $0x270] sm:$0xff]
    %v547 = vld [vmem:[#allocation4 + $0x278] sm:$0xff]
    %v548 = vld [vmem:[#allocation4 + $0x280] sm:$0xff]
    %v549 = vld [vmem:[#allocation4 + $0x288] sm:$0xff]
    %v550 = vld [vmem:[#allocation4 + $0x290] sm:$0xff]
    %v551 = vld [vmem:[#allocation4 + $0x298] sm:$0xff]
    %v552 = vld [vmem:[#allocation4 + $0x2a0] sm:$0xff]
    %v553 = vld [vmem:[#allocation4 + $0x2a8] sm:$0xff]
    %v554 = vld [vmem:[#allocation4 + $0x2b0] sm:$0xff]
    %v555 = vld [vmem:[#allocation4 + $0x2b8] sm:$0xff]
    %v556 = vld [vmem:[#allocation4 + $0x2c0] sm:$0xff]
    %v557 = vld [vmem:[#allocation4 + $0x2c8] sm:$0xff]
    %v558 = vld [vmem:[#allocation4 + $0x2d0] sm:$0xff]
    %v559 = vld [vmem:[#allocation4 + $0x2d8] sm:$0xff]
    %v560 = vld [vmem:[#allocation4 + $0x2e0] sm:$0xff]
    %v561 = vld [vmem:[#allocation4 + $0x2e8] sm:$0xff]
    %v562 = vld [vmem:[#allocation4 + $0x2f0] sm:$0xff]
    %v563 = vld [vmem:[#allocation4 + $0x2f8] sm:$0xff]
    %v564 = vld [vmem:[#allocation4 + $0x300] sm:$0xff]
    %v565 = vld [vmem:[#allocation4 + $0x308] sm:$0xff]
    %v566 = vld [vmem:[#allocation4 + $0x310] sm:$0xff]
    %v567 = vld [vmem:[#allocation4 + $0x318] sm:$0xff]
    %v568 = vld [vmem:[#allocation4 + $0x320] sm:$0xff]
    %v569 = vld [vmem:[#allocation4 + $0x328] sm:$0xff]
    %v570 = vld [vmem:[#allocation4 + $0x330] sm:$0xff]
    %v571 = vld [vmem:[#allocation4 + $0x338] sm:$0xff]
    %v572 = vld [vmem:[#allocation4 + $0x340] sm:$0xff]
    %v573 = vld [vmem:[#allocation4 + $0x348] sm:$0xff]
    %v574 = vld [vmem:[#allocation4 + $0x350] sm:$0xff]
    %v575 = vld [vmem:[#allocation4 + $0x358] sm:$0xff]
    %v576 = vld [vmem:[#allocation4 + $0x360] sm:$0xff]
    %v577 = vld [vmem:[#allocation4 + $0x368] sm:$0xff]
    %v578 = vld [vmem:[#allocation4 + $0x370] sm:$0xff]
    %v579 = vld [vmem:[#allocation4 + $0x378] sm:$0xff]
    %v580 = vld [vmem:[#allocation4 + $0x380] sm:$0xff]
    %v581 = vld [vmem:[#allocation4 + $0x388] sm:$0xff]
    %v582 = vld [vmem:[#allocation4 + $0x390] sm:$0xff]
    %v583 = vld [vmem:[#allocation4 + $0x398] sm:$0xff]
    %v584 = vld [vmem:[#allocation4 + $0x3a0] sm:$0xff]
    %v585 = vld [vmem:[#allocation4 + $0x3a8] sm:$0xff]
    %v586 = vld [vmem:[#allocation4 + $0x3b0] sm:$0xff]
    %v587 = vld [vmem:[#allocation4 + $0x3b8] sm:$0xff]
    %v588 = vld [vmem:[#allocation4 + $0x3c0] sm:$0xff]
    %v589 = vld [vmem:[#allocation4 + $0x3c8] sm:$0xff]
    %v590 = vld [vmem:[#allocation4 + $0x3d0] sm:$0xff]
    %v591 = vld [vmem:[#allocation4 + $0x3d8] sm:$0xff]
    %v592 = vld [vmem:[#allocation4 + $0x3e0] sm:$0xff]
    %v593 = vld [vmem:[#allocation4 + $0x3e8] sm:$0xff]
    %v594 = vld [vmem:[#allocation4 + $0x3f0] sm:$0xff]
    %v595 = vld [vmem:[#allocation4 + $0x3f8] sm:$0xff]
    %v596 = vld [vmem:[#allocation4 + $0x400] sm:$0xff]
    %v597 = vld [vmem:[#allocation4 + $0x408] sm:$0xff]
    %v598 = vld [vmem:[#allocation4 + $0x410] sm:$0xff]
    %v599 = vld [vmem:[#allocation4 + $0x418] sm:$0xff]
    %v600 = vld [vmem:[#allocation4 + $0x420] sm:$0xff]
    %v601 = vld [vmem:[#allocation4 + $0x428] sm:$0xff]
    %v602 = vld [vmem:[#allocation4 + $0x430] sm:$0xff]
    %v603 = vld [vmem:[#allocation4 + $0x438] sm:$0xff]
    %v604 = vld [vmem:[#allocation4 + $0x440] sm:$0xff]
    %v605 = vld [vmem:[#allocation4 + $0x448] sm:$0xff]
    %v606 = vld [vmem:[#allocation4 + $0x450] sm:$0xff]
    %v607 = vld [vmem:[#allocation4 + $0x458] sm:$0xff]
    %v608 = vld [vmem:[#allocation4 + $0x460] sm:$0xff]
    %v609 = vld [vmem:[#allocation4 + $0x468] sm:$0xff]
    %v610 = vld [vmem:[#allocation4 + $0x470] sm:$0xff]
    %v611 = vld [vmem:[#allocation4 + $0x478] sm:$0xff]
    %v612 = vld [vmem:[#allocation4 + $0x480] sm:$0xff]
    %v613 = vld [vmem:[#allocation4 + $0x488] sm:$0xff]
    %v614 = vld [vmem:[#allocation4 + $0x490] sm:$0xff]
    %v615 = vld [vmem:[#allocation4 + $0x498] sm:$0xff]
    %v616 = vld [vmem:[#allocation4 + $0x4a0] sm:$0xff]
    %v617 = vld [vmem:[#allocation4 + $0x4a8] sm:$0xff]
    %v618 = vld [vmem:[#allocation4 + $0x4b0] sm:$0xff]
    %v619 = vld [vmem:[#allocation4 + $0x4b8] sm:$0xff]
    %v620 = vld [vmem:[#allocation4 + $0x4c0] sm:$0xff]
    %v621 = vld [vmem:[#allocation4 + $0x4c8] sm:$0xff]
    %v622 = vld [vmem:[#allocation4 + $0x4d0] sm:$0xff]
    %v623 = vld [vmem:[#allocation4 + $0x4d8] sm:$0xff]
    %v624 = vld [vmem:[#allocation4 + $0x4e0] sm:$0xff]
    %v625 = vld [vmem:[#allocation4 + $0x4e8] sm:$0xff]
    %v626 = vld [vmem:[#allocation4 + $0x4f0] sm:$0xff]
    %v627 = vld [vmem:[#allocation4 + $0x4f8] sm:$0xff]
    %v628 = vld [vmem:[#allocation4 + $0x500] sm:$0xff]
    %v629 = vld [vmem:[#allocation4 + $0x508] sm:$0xff]
    %v630 = vld [vmem:[#allocation4 + $0x510] sm:$0xff]
    %v631 = vld [vmem:[#allocation4 + $0x518] sm:$0xff]
    %v632 = vld [vmem:[#allocation4 + $0x520] sm:$0xff]
    %v633 = vld [vmem:[#allocation4 + $0x528] sm:$0xff]
    %v634 = vld [vmem:[#allocation4 + $0x530] sm:$0xff]
    %v635 = vld [vmem:[#allocation4 + $0x538] sm:$0xff]
    %v636 = vld [vmem:[#allocation4 + $0x540] sm:$0xff]
    %v637 = vld [vmem:[#allocation4 + $0x548] sm:$0xff]
    %v638 = vld [vmem:[#allocation4 + $0x550] sm:$0xff]
    %v639 = vld [vmem:[#allocation4 + $0x558] sm:$0xff]
    %v640 = vld [vmem:[#allocation4 + $0x560] sm:$0xff]
    %v641 = vld [vmem:[#allocation4 + $0x568] sm:$0xff]
    %v642 = vld [vmem:[#allocation4 + $0x570] sm:$0xff]
    %v643 = vld [vmem:[#allocation4 + $0x578] sm:$0xff]
    %v644 = vld [vmem:[#allocation4 + $0x580] sm:$0xff]
    %v645 = vld [vmem:[#allocation4 + $0x588] sm:$0xff]
    %v646 = vld [vmem:[#allocation4 + $0x590] sm:$0xff]
    %v647 = vld [vmem:[#allocation4 + $0x598] sm:$0xff]
    %v648 = vld [vmem:[#allocation4 + $0x5a0] sm:$0xff]
    %v649 = vld [vmem:[#allocation4 + $0x5a8] sm:$0xff]
    %v650 = vld [vmem:[#allocation4 + $0x5b0] sm:$0xff]
    %v651 = vld [vmem:[#allocation4 + $0x5b8] sm:$0xff]
    %v652 = vld [vmem:[#allocation4 + $0x5c0] sm:$0xff]
    %v653 = vld [vmem:[#allocation4 + $0x5c8] sm:$0xff]
    %v654 = vld [vmem:[#allocation4 + $0x5d0] sm:$0xff]
    %v655 = vld [vmem:[#allocation4 + $0x5d8] sm:$0xff]
    %v656 = vld [vmem:[#allocation4 + $0x5e0] sm:$0xff]
    %v657 = vld [vmem:[#allocation4 + $0x5e8] sm:$0xff]
    %v658 = vld [vmem:[#allocation4 + $0x5f0] sm:$0xff]
    %v659 = vld [vmem:[#allocation4 + $0x5f8] sm:$0xff]
    %v660 = vld [vmem:[%s5] sm:$0xf]
    %v662 = vlaneseq
    %v663 = vshrl.u32 %v662, 7
    %v664 = vsub.s32 0, %v663
    %v665 = vrot.slane %v660, %v664
    %v666 = vlaneseq
    %v667 = vshrl.u32 %v666, 7
    %v668 = vsub.s32 1, %v667
    %v669 = vrot.slane %v660, %v668
    %v670 = vlaneseq
    %v671 = vshrl.u32 %v670, 7
    %v672 = vsub.s32 2, %v671
    %v673 = vrot.slane %v660, %v672
    %v674 = vlaneseq
    %v675 = vshrl.u32 %v674, 7
    %v676 = vsub.s32 3, %v675
    %v677 = vrot.slane %v660, %v676
    %v874 = vunpack.c.l.b16 %v468
    %v875 = vunpack.c.h.b16 %v468
    %v876 = vunpack.c.l.b16 %v469
    %v877 = vunpack.c.h.b16 %v469
    %v878 = vunpack.c.l.b16 %v470
    %v879 = vunpack.c.h.b16 %v470
    %v880 = vunpack.c.l.b16 %v471
    %v881 = vunpack.c.h.b16 %v471
    %v882 = vunpack.c.l.b16 %v472
    %v883 = vunpack.c.h.b16 %v472
    %v884 = vunpack.c.l.b16 %v473
    %v885 = vunpack.c.h.b16 %v473
    %v886 = vunpack.c.l.b16 %v474
    %v887 = vunpack.c.h.b16 %v474
    %v888 = vunpack.c.l.b16 %v475
    %v889 = vunpack.c.h.b16 %v475
    %v890 = vunpack.c.l.b16 %v476
    %v891 = vunpack.c.h.b16 %v476
    %v892 = vunpack.c.l.b16 %v477
    %v893 = vunpack.c.h.b16 %v477
    %v894 = vunpack.c.l.b16 %v478
    %v895 = vunpack.c.h.b16 %v478
    %v896 = vunpack.c.l.b16 %v479
    %v897 = vunpack.c.h.b16 %v479
    %v898 = vunpack.c.l.b16 %v480
    %v899 = vunpack.c.h.b16 %v480
    %v900 = vunpack.c.l.b16 %v481
    %v901 = vunpack.c.h.b16 %v481
    %v902 = vunpack.c.l.b16 %v482
    %v903 = vunpack.c.h.b16 %v482
    %v904 = vunpack.c.l.b16 %v483
    %v905 = vunpack.c.h.b16 %v483
    %v906 = vunpack.c.l.b16 %v484
    %v907 = vunpack.c.h.b16 %v484
    %v908 = vunpack.c.l.b16 %v485
    %v909 = vunpack.c.h.b16 %v485
    %v910 = vunpack.c.l.b16 %v486
    %v911 = vunpack.c.h.b16 %v486
    %v912 = vunpack.c.l.b16 %v487
    %v913 = vunpack.c.h.b16 %v487
    %v914 = vunpack.c.l.b16 %v488
    %v915 = vunpack.c.h.b16 %v488
    %v916 = vunpack.c.l.b16 %v489
    %v917 = vunpack.c.h.b16 %v489
    %v918 = vunpack.c.l.b16 %v490
    %v919 = vunpack.c.h.b16 %v490
    %v920 = vunpack.c.l.b16 %v491
    %v921 = vunpack.c.h.b16 %v491
    %v922 = vunpack.c.l.b16 %v492
    %v923 = vunpack.c.h.b16 %v492
    %v924 = vunpack.c.l.b16 %v493
    %v925 = vunpack.c.h.b16 %v493
    %v926 = vunpack.c.l.b16 %v494
    %v927 = vunpack.c.h.b16 %v494
    %v928 = vunpack.c.l.b16 %v495
    %v929 = vunpack.c.h.b16 %v495
    %v930 = vunpack.c.l.b16 %v496
    %v931 = vunpack.c.h.b16 %v496
    %v932 = vunpack.c.l.b16 %v497
    %v933 = vunpack.c.h.b16 %v497
    %v934 = vunpack.c.l.b16 %v498
    %v935 = vunpack.c.h.b16 %v498
    %v936 = vunpack.c.l.b16 %v499
    %v937 = vunpack.c.h.b16 %v499
    %v938 = vunpack.c.l.b16 %v500
    %v939 = vunpack.c.h.b16 %v500
    %v940 = vunpack.c.l.b16 %v501
    %v941 = vunpack.c.h.b16 %v501
    %v942 = vunpack.c.l.b16 %v502
    %v943 = vunpack.c.h.b16 %v502
    %v944 = vunpack.c.l.b16 %v503
    %v945 = vunpack.c.h.b16 %v503
    %v946 = vunpack.c.l.b16 %v504
    %v947 = vunpack.c.h.b16 %v504
    %v948 = vunpack.c.l.b16 %v505
    %v949 = vunpack.c.h.b16 %v505
    %v950 = vunpack.c.l.b16 %v506
    %v951 = vunpack.c.h.b16 %v506
    %v952 = vunpack.c.l.b16 %v507
    %v953 = vunpack.c.h.b16 %v507
    %v954 = vunpack.c.l.b16 %v508
    %v955 = vunpack.c.h.b16 %v508
    %v956 = vunpack.c.l.b16 %v509
    %v957 = vunpack.c.h.b16 %v509
    %v958 = vunpack.c.l.b16 %v510
    %v959 = vunpack.c.h.b16 %v510
    %v960 = vunpack.c.l.b16 %v511
    %v961 = vunpack.c.h.b16 %v511
    %v962 = vunpack.c.l.b16 %v512
    %v963 = vunpack.c.h.b16 %v512
    %v964 = vunpack.c.l.b16 %v513
    %v965 = vunpack.c.h.b16 %v513
    %v966 = vunpack.c.l.b16 %v514
    %v967 = vunpack.c.h.b16 %v514
    %v968 = vunpack.c.l.b16 %v515
    %v969 = vunpack.c.h.b16 %v515
    %v970 = vunpack.c.l.b16 %v516
    %v971 = vunpack.c.h.b16 %v516
    %v972 = vunpack.c.l.b16 %v517
    %v973 = vunpack.c.h.b16 %v517
    %v974 = vunpack.c.l.b16 %v518
    %v975 = vunpack.c.h.b16 %v518
    %v976 = vunpack.c.l.b16 %v519
    %v977 = vunpack.c.h.b16 %v519
    %v978 = vunpack.c.l.b16 %v520
    %v979 = vunpack.c.h.b16 %v520
    %v980 = vunpack.c.l.b16 %v521
    %v981 = vunpack.c.h.b16 %v521
    %v982 = vunpack.c.l.b16 %v522
    %v983 = vunpack.c.h.b16 %v522
    %v984 = vunpack.c.l.b16 %v523
    %v985 = vunpack.c.h.b16 %v523
    %v986 = vunpack.c.l.b16 %v524
    %v987 = vunpack.c.h.b16 %v524
    %v988 = vunpack.c.l.b16 %v525
    %v989 = vunpack.c.h.b16 %v525
    %v990 = vunpack.c.l.b16 %v526
    %v991 = vunpack.c.h.b16 %v526
    %v992 = vunpack.c.l.b16 %v527
    %v993 = vunpack.c.h.b16 %v527
    %v994 = vunpack.c.l.b16 %v528
    %v995 = vunpack.c.h.b16 %v528
    %v996 = vunpack.c.l.b16 %v529
    %v997 = vunpack.c.h.b16 %v529
    %v998 = vunpack.c.l.b16 %v530
    %v999 = vunpack.c.h.b16 %v530
    %v1000 = vunpack.c.l.b16 %v531
    %v1001 = vunpack.c.h.b16 %v531
    %v1002 = vunpack.c.l.b16 %v532
    %v1003 = vunpack.c.h.b16 %v532
    %v1004 = vunpack.c.l.b16 %v533
    %v1005 = vunpack.c.h.b16 %v533
    %v1006 = vunpack.c.l.b16 %v534
    %v1007 = vunpack.c.h.b16 %v534
    %v1008 = vunpack.c.l.b16 %v535
    %v1009 = vunpack.c.h.b16 %v535
    %v1010 = vunpack.c.l.b16 %v536
    %v1011 = vunpack.c.h.b16 %v536
    %v1012 = vunpack.c.l.b16 %v537
    %v1013 = vunpack.c.h.b16 %v537
    %v1014 = vunpack.c.l.b16 %v538
    %v1015 = vunpack.c.h.b16 %v538
    %v1016 = vunpack.c.l.b16 %v539
    %v1017 = vunpack.c.h.b16 %v539
    %v1018 = vunpack.c.l.b16 %v540
    %v1019 = vunpack.c.h.b16 %v540
    %v1020 = vunpack.c.l.b16 %v541
    %v1021 = vunpack.c.h.b16 %v541
    %v1022 = vunpack.c.l.b16 %v542
    %v1023 = vunpack.c.h.b16 %v542
    %v1024 = vunpack.c.l.b16 %v543
    %v1025 = vunpack.c.h.b16 %v543
    %v1026 = vunpack.c.l.b16 %v544
    %v1027 = vunpack.c.h.b16 %v544
    %v1028 = vunpack.c.l.b16 %v545
    %v1029 = vunpack.c.h.b16 %v545
    %v1030 = vunpack.c.l.b16 %v546
    %v1031 = vunpack.c.h.b16 %v546
    %v1032 = vunpack.c.l.b16 %v547
    %v1033 = vunpack.c.h.b16 %v547
    %v1034 = vunpack.c.l.b16 %v548
    %v1035 = vunpack.c.h.b16 %v548
    %v1036 = vunpack.c.l.b16 %v549
    %v1037 = vunpack.c.h.b16 %v549
    %v1038 = vunpack.c.l.b16 %v550
    %v1039 = vunpack.c.h.b16 %v550
    %v1040 = vunpack.c.l.b16 %v551
    %v1041 = vunpack.c.h.b16 %v551
    %v1042 = vunpack.c.l.b16 %v552
    %v1043 = vunpack.c.h.b16 %v552
    %v1044 = vunpack.c.l.b16 %v553
    %v1045 = vunpack.c.h.b16 %v553
    %v1046 = vunpack.c.l.b16 %v554
    %v1047 = vunpack.c.h.b16 %v554
    %v1048 = vunpack.c.l.b16 %v555
    %v1049 = vunpack.c.h.b16 %v555
    %v1050 = vunpack.c.l.b16 %v556
    %v1051 = vunpack.c.h.b16 %v556
    %v1052 = vunpack.c.l.b16 %v557
    %v1053 = vunpack.c.h.b16 %v557
    %v1054 = vunpack.c.l.b16 %v558
    %v1055 = vunpack.c.h.b16 %v558
    %v1056 = vunpack.c.l.b16 %v559
    %v1057 = vunpack.c.h.b16 %v559
    %v1058 = vunpack.c.l.b16 %v560
    %v1059 = vunpack.c.h.b16 %v560
    %v1060 = vunpack.c.l.b16 %v561
    %v1061 = vunpack.c.h.b16 %v561
    %v1062 = vunpack.c.l.b16 %v562
    %v1063 = vunpack.c.h.b16 %v562
    %v1064 = vunpack.c.l.b16 %v563
    %v1065 = vunpack.c.h.b16 %v563
    %v1066 = vunpack.c.l.b16 %v564
    %v1067 = vunpack.c.h.b16 %v564
    %v1068 = vunpack.c.l.b16 %v565
    %v1069 = vunpack.c.h.b16 %v565
    %v1070 = vunpack.c.l.b16 %v566
    %v1071 = vunpack.c.h.b16 %v566
    %v1072 = vunpack.c.l.b16 %v567
    %v1073 = vunpack.c.h.b16 %v567
    %v1074 = vunpack.c.l.b16 %v568
    %v1075 = vunpack.c.h.b16 %v568
    %v1076 = vunpack.c.l.b16 %v569
    %v1077 = vunpack.c.h.b16 %v569
    %v1078 = vunpack.c.l.b16 %v570
    %v1079 = vunpack.c.h.b16 %v570
    %v1080 = vunpack.c.l.b16 %v571
    %v1081 = vunpack.c.h.b16 %v571
    %v1082 = vunpack.c.l.b16 %v572
    %v1083 = vunpack.c.h.b16 %v572
    %v1084 = vunpack.c.l.b16 %v573
    %v1085 = vunpack.c.h.b16 %v573
    %v1086 = vunpack.c.l.b16 %v574
    %v1087 = vunpack.c.h.b16 %v574
    %v1088 = vunpack.c.l.b16 %v575
    %v1089 = vunpack.c.h.b16 %v575
    %v1090 = vunpack.c.l.b16 %v576
    %v1091 = vunpack.c.h.b16 %v576
    %v1092 = vunpack.c.l.b16 %v577
    %v1093 = vunpack.c.h.b16 %v577
    %v1094 = vunpack.c.l.b16 %v578
    %v1095 = vunpack.c.h.b16 %v578
    %v1096 = vunpack.c.l.b16 %v579
    %v1097 = vunpack.c.h.b16 %v579
    %v1098 = vunpack.c.l.b16 %v580
    %v1099 = vunpack.c.h.b16 %v580
    %v1100 = vunpack.c.l.b16 %v581
    %v1101 = vunpack.c.h.b16 %v581
    %v1102 = vunpack.c.l.b16 %v582
    %v1103 = vunpack.c.h.b16 %v582
    %v1104 = vunpack.c.l.b16 %v583
    %v1105 = vunpack.c.h.b16 %v583
    %v1106 = vunpack.c.l.b16 %v584
    %v1107 = vunpack.c.h.b16 %v584
    %v1108 = vunpack.c.l.b16 %v585
    %v1109 = vunpack.c.h.b16 %v585
    %v1110 = vunpack.c.l.b16 %v586
    %v1111 = vunpack.c.h.b16 %v586
    %v1112 = vunpack.c.l.b16 %v587
    %v1113 = vunpack.c.h.b16 %v587
    %v1114 = vunpack.c.l.b16 %v588
    %v1115 = vunpack.c.h.b16 %v588
    %v1116 = vunpack.c.l.b16 %v589
    %v1117 = vunpack.c.h.b16 %v589
    %v1118 = vunpack.c.l.b16 %v590
    %v1119 = vunpack.c.h.b16 %v590
    %v1120 = vunpack.c.l.b16 %v591
    %v1121 = vunpack.c.h.b16 %v591
    %v1122 = vunpack.c.l.b16 %v592
    %v1123 = vunpack.c.h.b16 %v592
    %v1124 = vunpack.c.l.b16 %v593
    %v1125 = vunpack.c.h.b16 %v593
    %v1126 = vunpack.c.l.b16 %v594
    %v1127 = vunpack.c.h.b16 %v594
    %v1128 = vunpack.c.l.b16 %v595
    %v1129 = vunpack.c.h.b16 %v595
    %v1130 = vunpack.c.l.b16 %v596
    %v1131 = vunpack.c.h.b16 %v596
    %v1132 = vunpack.c.l.b16 %v597
    %v1133 = vunpack.c.h.b16 %v597
    %v1134 = vunpack.c.l.b16 %v598
    %v1135 = vunpack.c.h.b16 %v598
    %v1136 = vunpack.c.l.b16 %v599
    %v1137 = vunpack.c.h.b16 %v599
    %v1138 = vunpack.c.l.b16 %v600
    %v1139 = vunpack.c.h.b16 %v600
    %v1140 = vunpack.c.l.b16 %v601
    %v1141 = vunpack.c.h.b16 %v601
    %v1142 = vunpack.c.l.b16 %v602
    %v1143 = vunpack.c.h.b16 %v602
    %v1144 = vunpack.c.l.b16 %v603
    %v1145 = vunpack.c.h.b16 %v603
    %v1146 = vunpack.c.l.b16 %v604
    %v1147 = vunpack.c.h.b16 %v604
    %v1148 = vunpack.c.l.b16 %v605
    %v1149 = vunpack.c.h.b16 %v605
    %v1150 = vunpack.c.l.b16 %v606
    %v1151 = vunpack.c.h.b16 %v606
    %v1152 = vunpack.c.l.b16 %v607
    %v1153 = vunpack.c.h.b16 %v607
    %v1154 = vunpack.c.l.b16 %v608
    %v1155 = vunpack.c.h.b16 %v608
    %v1156 = vunpack.c.l.b16 %v609
    %v1157 = vunpack.c.h.b16 %v609
    %v1158 = vunpack.c.l.b16 %v610
    %v1159 = vunpack.c.h.b16 %v610
    %v1160 = vunpack.c.l.b16 %v611
    %v1161 = vunpack.c.h.b16 %v611
    %v1162 = vunpack.c.l.b16 %v612
    %v1163 = vunpack.c.h.b16 %v612
    %v1164 = vunpack.c.l.b16 %v613
    %v1165 = vunpack.c.h.b16 %v613
    %v1166 = vunpack.c.l.b16 %v614
    %v1167 = vunpack.c.h.b16 %v614
    %v1168 = vunpack.c.l.b16 %v615
    %v1169 = vunpack.c.h.b16 %v615
    %v1170 = vunpack.c.l.b16 %v616
    %v1171 = vunpack.c.h.b16 %v616
    %v1172 = vunpack.c.l.b16 %v617
    %v1173 = vunpack.c.h.b16 %v617
    %v1174 = vunpack.c.l.b16 %v618
    %v1175 = vunpack.c.h.b16 %v618
    %v1176 = vunpack.c.l.b16 %v619
    %v1177 = vunpack.c.h.b16 %v619
    %v1178 = vunpack.c.l.b16 %v620
    %v1179 = vunpack.c.h.b16 %v620
    %v1180 = vunpack.c.l.b16 %v621
    %v1181 = vunpack.c.h.b16 %v621
    %v1182 = vunpack.c.l.b16 %v622
    %v1183 = vunpack.c.h.b16 %v622
    %v1184 = vunpack.c.l.b16 %v623
    %v1185 = vunpack.c.h.b16 %v623
    %v1186 = vunpack.c.l.b16 %v624
    %v1187 = vunpack.c.h.b16 %v624
    %v1188 = vunpack.c.l.b16 %v625
    %v1189 = vunpack.c.h.b16 %v625
    %v1190 = vunpack.c.l.b16 %v626
    %v1191 = vunpack.c.h.b16 %v626
    %v1192 = vunpack.c.l.b16 %v627
    %v1193 = vunpack.c.h.b16 %v627
    %v1194 = vunpack.c.l.b16 %v628
    %v1195 = vunpack.c.h.b16 %v628
    %v1196 = vunpack.c.l.b16 %v629
    %v1197 = vunpack.c.h.b16 %v629
    %v1198 = vunpack.c.l.b16 %v630
    %v1199 = vunpack.c.h.b16 %v630
    %v1200 = vunpack.c.l.b16 %v631
    %v1201 = vunpack.c.h.b16 %v631
    %v1202 = vunpack.c.l.b16 %v632
    %v1203 = vunpack.c.h.b16 %v632
    %v1204 = vunpack.c.l.b16 %v633
    %v1205 = vunpack.c.h.b16 %v633
    %v1206 = vunpack.c.l.b16 %v634
    %v1207 = vunpack.c.h.b16 %v634
    %v1208 = vunpack.c.l.b16 %v635
    %v1209 = vunpack.c.h.b16 %v635
    %v1210 = vunpack.c.l.b16 %v636
    %v1211 = vunpack.c.h.b16 %v636
    %v1212 = vunpack.c.l.b16 %v637
    %v1213 = vunpack.c.h.b16 %v637
    %v1214 = vunpack.c.l.b16 %v638
    %v1215 = vunpack.c.h.b16 %v638
    %v1216 = vunpack.c.l.b16 %v639
    %v1217 = vunpack.c.h.b16 %v639
    %v1218 = vunpack.c.l.b16 %v640
    %v1219 = vunpack.c.h.b16 %v640
    %v1220 = vunpack.c.l.b16 %v641
    %v1221 = vunpack.c.h.b16 %v641
    %v1222 = vunpack.c.l.b16 %v642
    %v1223 = vunpack.c.h.b16 %v642
    %v1224 = vunpack.c.l.b16 %v643
    %v1225 = vunpack.c.h.b16 %v643
    %v1226 = vunpack.c.l.b16 %v644
    %v1227 = vunpack.c.h.b16 %v644
    %v1228 = vunpack.c.l.b16 %v645
    %v1229 = vunpack.c.h.b16 %v645
    %v1230 = vunpack.c.l.b16 %v646
    %v1231 = vunpack.c.h.b16 %v646
    %v1232 = vunpack.c.l.b16 %v647
    %v1233 = vunpack.c.h.b16 %v647
    %v1234 = vunpack.c.l.b16 %v648
    %v1235 = vunpack.c.h.b16 %v648
    %v1236 = vunpack.c.l.b16 %v649
    %v1237 = vunpack.c.h.b16 %v649
    %v1238 = vunpack.c.l.b16 %v650
    %v1239 = vunpack.c.h.b16 %v650
    %v1240 = vunpack.c.l.b16 %v651
    %v1241 = vunpack.c.h.b16 %v651
    %v1242 = vunpack.c.l.b16 %v652
    %v1243 = vunpack.c.h.b16 %v652
    %v1244 = vunpack.c.l.b16 %v653
    %v1245 = vunpack.c.h.b16 %v653
    %v1246 = vunpack.c.l.b16 %v654
    %v1247 = vunpack.c.h.b16 %v654
    %v1248 = vunpack.c.l.b16 %v655
    %v1249 = vunpack.c.h.b16 %v655
    %v1250 = vunpack.c.l.b16 %v656
    %v1251 = vunpack.c.h.b16 %v656
    %v1252 = vunpack.c.l.b16 %v657
    %v1253 = vunpack.c.h.b16 %v657
    %v1254 = vunpack.c.l.b16 %v658
    %v1255 = vunpack.c.h.b16 %v658
    %v1256 = vunpack.c.l.b16 %v659
    %v1257 = vunpack.c.h.b16 %v659
    %v1258 = vpack.c.b16 %v878, %v874
    %v1259 = vpack.c.b16 %v879, %v875
    %v1260 = vpack.c.b16 %v880, %v876
    %v1261 = vpack.c.b16 %v881, %v877
    %v1262 = vpack.c.b16 %v886, %v882
    %v1263 = vpack.c.b16 %v887, %v883
    %v1264 = vpack.c.b16 %v888, %v884
    %v1265 = vpack.c.b16 %v889, %v885
    %v1266 = vpack.c.b16 %v894, %v890
    %v1267 = vpack.c.b16 %v895, %v891
    %v1268 = vpack.c.b16 %v896, %v892
    %v1269 = vpack.c.b16 %v897, %v893
    %v1270 = vpack.c.b16 %v902, %v898
    %v1271 = vpack.c.b16 %v903, %v899
    %v1272 = vpack.c.b16 %v904, %v900
    %v1273 = vpack.c.b16 %v905, %v901
    %v1274 = vpack.c.b16 %v910, %v906
    %v1275 = vpack.c.b16 %v911, %v907
    %v1276 = vpack.c.b16 %v912, %v908
    %v1277 = vpack.c.b16 %v913, %v909
    %v1278 = vpack.c.b16 %v918, %v914
    %v1279 = vpack.c.b16 %v919, %v915
    %v1280 = vpack.c.b16 %v920, %v916
    %v1281 = vpack.c.b16 %v921, %v917
    %v1282 = vpack.c.b16 %v926, %v922
    %v1283 = vpack.c.b16 %v927, %v923
    %v1284 = vpack.c.b16 %v928, %v924
    %v1285 = vpack.c.b16 %v929, %v925
    %v1286 = vpack.c.b16 %v934, %v930
    %v1287 = vpack.c.b16 %v935, %v931
    %v1288 = vpack.c.b16 %v936, %v932
    %v1289 = vpack.c.b16 %v937, %v933
    %v1290 = vpack.c.b16 %v942, %v938
    %v1291 = vpack.c.b16 %v943, %v939
    %v1292 = vpack.c.b16 %v944, %v940
    %v1293 = vpack.c.b16 %v945, %v941
    %v1294 = vpack.c.b16 %v950, %v946
    %v1295 = vpack.c.b16 %v951, %v947
    %v1296 = vpack.c.b16 %v952, %v948
    %v1297 = vpack.c.b16 %v953, %v949
    %v1298 = vpack.c.b16 %v958, %v954
    %v1299 = vpack.c.b16 %v959, %v955
    %v1300 = vpack.c.b16 %v960, %v956
    %v1301 = vpack.c.b16 %v961, %v957
    %v1302 = vpack.c.b16 %v966, %v962
    %v1303 = vpack.c.b16 %v967, %v963
    %v1304 = vpack.c.b16 %v968, %v964
    %v1305 = vpack.c.b16 %v969, %v965
    %v1306 = vpack.c.b16 %v974, %v970
    %v1307 = vpack.c.b16 %v975, %v971
    %v1308 = vpack.c.b16 %v976, %v972
    %v1309 = vpack.c.b16 %v977, %v973
    %v1310 = vpack.c.b16 %v982, %v978
    %v1311 = vpack.c.b16 %v983, %v979
    %v1312 = vpack.c.b16 %v984, %v980
    %v1313 = vpack.c.b16 %v985, %v981
    %v1314 = vpack.c.b16 %v990, %v986
    %v1315 = vpack.c.b16 %v991, %v987
    %v1316 = vpack.c.b16 %v992, %v988
    %v1317 = vpack.c.b16 %v993, %v989
    %v1318 = vpack.c.b16 %v998, %v994
    %v1319 = vpack.c.b16 %v999, %v995
    %v1320 = vpack.c.b16 %v1000, %v996
    %v1321 = vpack.c.b16 %v1001, %v997
    %v1322 = vpack.c.b16 %v1006, %v1002
    %v1323 = vpack.c.b16 %v1007, %v1003
    %v1324 = vpack.c.b16 %v1008, %v1004
    %v1325 = vpack.c.b16 %v1009, %v1005
    %v1326 = vpack.c.b16 %v1014, %v1010
    %v1327 = vpack.c.b16 %v1015, %v1011
    %v1328 = vpack.c.b16 %v1016, %v1012
    %v1329 = vpack.c.b16 %v1017, %v1013
    %v1330 = vpack.c.b16 %v1022, %v1018
    %v1331 = vpack.c.b16 %v1023, %v1019
    %v1332 = vpack.c.b16 %v1024, %v1020
    %v1333 = vpack.c.b16 %v1025, %v1021
    %v1334 = vpack.c.b16 %v1030, %v1026
    %v1335 = vpack.c.b16 %v1031, %v1027
    %v1336 = vpack.c.b16 %v1032, %v1028
    %v1337 = vpack.c.b16 %v1033, %v1029
    %v1338 = vpack.c.b16 %v1038, %v1034
    %v1339 = vpack.c.b16 %v1039, %v1035
    %v1340 = vpack.c.b16 %v1040, %v1036
    %v1341 = vpack.c.b16 %v1041, %v1037
    %v1342 = vpack.c.b16 %v1046, %v1042
    %v1343 = vpack.c.b16 %v1047, %v1043
    %v1344 = vpack.c.b16 %v1048, %v1044
    %v1345 = vpack.c.b16 %v1049, %v1045
    %v1346 = vpack.c.b16 %v1054, %v1050
    %v1347 = vpack.c.b16 %v1055, %v1051
    %v1348 = vpack.c.b16 %v1056, %v1052
    %v1349 = vpack.c.b16 %v1057, %v1053
    %v1350 = vpack.c.b16 %v1062, %v1058
    %v1351 = vpack.c.b16 %v1063, %v1059
    %v1352 = vpack.c.b16 %v1064, %v1060
    %v1353 = vpack.c.b16 %v1065, %v1061
    %v1354 = vpack.c.b16 %v1070, %v1066
    %v1355 = vpack.c.b16 %v1071, %v1067
    %v1356 = vpack.c.b16 %v1072, %v1068
    %v1357 = vpack.c.b16 %v1073, %v1069
    %v1358 = vpack.c.b16 %v1078, %v1074
    %v1359 = vpack.c.b16 %v1079, %v1075
    %v1360 = vpack.c.b16 %v1080, %v1076
    %v1361 = vpack.c.b16 %v1081, %v1077
    %v1362 = vpack.c.b16 %v1086, %v1082
    %v1363 = vpack.c.b16 %v1087, %v1083
    %v1364 = vpack.c.b16 %v1088, %v1084
    %v1365 = vpack.c.b16 %v1089, %v1085
    %v1366 = vpack.c.b16 %v1094, %v1090
    %v1367 = vpack.c.b16 %v1095, %v1091
    %v1368 = vpack.c.b16 %v1096, %v1092
    %v1369 = vpack.c.b16 %v1097, %v1093
    %v1370 = vpack.c.b16 %v1102, %v1098
    %v1371 = vpack.c.b16 %v1103, %v1099
    %v1372 = vpack.c.b16 %v1104, %v1100
    %v1373 = vpack.c.b16 %v1105, %v1101
    %v1374 = vpack.c.b16 %v1110, %v1106
    %v1375 = vpack.c.b16 %v1111, %v1107
    %v1376 = vpack.c.b16 %v1112, %v1108
    %v1377 = vpack.c.b16 %v1113, %v1109
    %v1378 = vpack.c.b16 %v1118, %v1114
    %v1379 = vpack.c.b16 %v1119, %v1115
    %v1380 = vpack.c.b16 %v1120, %v1116
    %v1381 = vpack.c.b16 %v1121, %v1117
    %v1382 = vpack.c.b16 %v1126, %v1122
    %v1383 = vpack.c.b16 %v1127, %v1123
    %v1384 = vpack.c.b16 %v1128, %v1124
    %v1385 = vpack.c.b16 %v1129, %v1125
    %v1386 = vpack.c.b16 %v1134, %v1130
    %v1387 = vpack.c.b16 %v1135, %v1131
    %v1388 = vpack.c.b16 %v1136, %v1132
    %v1389 = vpack.c.b16 %v1137, %v1133
    %v1390 = vpack.c.b16 %v1142, %v1138
    %v1391 = vpack.c.b16 %v1143, %v1139
    %v1392 = vpack.c.b16 %v1144, %v1140
    %v1393 = vpack.c.b16 %v1145, %v1141
    %v1394 = vpack.c.b16 %v1150, %v1146
    %v1395 = vpack.c.b16 %v1151, %v1147
    %v1396 = vpack.c.b16 %v1152, %v1148
    %v1397 = vpack.c.b16 %v1153, %v1149
    %v1398 = vpack.c.b16 %v1158, %v1154
    %v1399 = vpack.c.b16 %v1159, %v1155
    %v1400 = vpack.c.b16 %v1160, %v1156
    %v1401 = vpack.c.b16 %v1161, %v1157
    %v1402 = vpack.c.b16 %v1166, %v1162
    %v1403 = vpack.c.b16 %v1167, %v1163
    %v1404 = vpack.c.b16 %v1168, %v1164
    %v1405 = vpack.c.b16 %v1169, %v1165
    %v1406 = vpack.c.b16 %v1174, %v1170
    %v1407 = vpack.c.b16 %v1175, %v1171
    %v1408 = vpack.c.b16 %v1176, %v1172
    %v1409 = vpack.c.b16 %v1177, %v1173
    %v1410 = vpack.c.b16 %v1182, %v1178
    %v1411 = vpack.c.b16 %v1183, %v1179
    %v1412 = vpack.c.b16 %v1184, %v1180
    %v1413 = vpack.c.b16 %v1185, %v1181
    %v1414 = vpack.c.b16 %v1190, %v1186
    %v1415 = vpack.c.b16 %v1191, %v1187
    %v1416 = vpack.c.b16 %v1192, %v1188
    %v1417 = vpack.c.b16 %v1193, %v1189
    %v1418 = vpack.c.b16 %v1198, %v1194
    %v1419 = vpack.c.b16 %v1199, %v1195
    %v1420 = vpack.c.b16 %v1200, %v1196
    %v1421 = vpack.c.b16 %v1201, %v1197
    %v1422 = vpack.c.b16 %v1206, %v1202
    %v1423 = vpack.c.b16 %v1207, %v1203
    %v1424 = vpack.c.b16 %v1208, %v1204
    %v1425 = vpack.c.b16 %v1209, %v1205
    %v1426 = vpack.c.b16 %v1214, %v1210
    %v1427 = vpack.c.b16 %v1215, %v1211
    %v1428 = vpack.c.b16 %v1216, %v1212
    %v1429 = vpack.c.b16 %v1217, %v1213
    %v1430 = vpack.c.b16 %v1222, %v1218
    %v1431 = vpack.c.b16 %v1223, %v1219
    %v1432 = vpack.c.b16 %v1224, %v1220
    %v1433 = vpack.c.b16 %v1225, %v1221
    %v1434 = vpack.c.b16 %v1230, %v1226
    %v1435 = vpack.c.b16 %v1231, %v1227
    %v1436 = vpack.c.b16 %v1232, %v1228
    %v1437 = vpack.c.b16 %v1233, %v1229
    %v1438 = vpack.c.b16 %v1238, %v1234
    %v1439 = vpack.c.b16 %v1239, %v1235
    %v1440 = vpack.c.b16 %v1240, %v1236
    %v1441 = vpack.c.b16 %v1241, %v1237
    %v1442 = vpack.c.b16 %v1246, %v1242
    %v1443 = vpack.c.b16 %v1247, %v1243
    %v1444 = vpack.c.b16 %v1248, %v1244
    %v1445 = vpack.c.b16 %v1249, %v1245
    %v1446 = vpack.c.b16 %v1254, %v1250
    %v1447 = vpack.c.b16 %v1255, %v1251
    %v1448 = vpack.c.b16 %v1256, %v1252
    %v1449 = vpack.c.b16 %v1257, %v1253
    %1642 = vmatprep.subr.bf16.mxu0 %v1259
    %1643 = vmatpush1.bf16.msra.mxu0 %v1258
    %1644 = vmatprep.subr.bf16.mxu0 %v1263
    %1645 = vmatpush1.bf16.msra.mxu0 %v1262
    %1646 = vmatprep.subr.bf16.mxu0 %v1267
    %1647 = vmatpush1.bf16.msra.mxu0 %v1266
    %1648 = vmatprep.subr.bf16.mxu0 %v1271
    %1649 = vmatpush1.bf16.msra.mxu0 %v1270
    %1650 = vmatprep.subr.bf16.mxu0 %v1275
    %1651 = vmatpush1.bf16.msra.mxu0 %v1274
    %1652 = vmatprep.subr.bf16.mxu0 %v1279
    %1653 = vmatpush1.bf16.msra.mxu0 %v1278
    %1654 = vmatprep.subr.bf16.mxu0 %v1283
    %1655 = vmatpush1.bf16.msra.mxu0 %v1282
    %1656 = vmatprep.subr.bf16.mxu0 %v1287
    %1657 = vmatpush1.bf16.msra.mxu0 %v1286
    %1658 = vmatprep.subr.bf16.mxu0 %v1291
    %1659 = vmatpush1.bf16.msra.mxu0 %v1290
    %1660 = vmatprep.subr.bf16.mxu0 %v1295
    %1661 = vmatpush1.bf16.msra.mxu0 %v1294
    %1662 = vmatprep.subr.bf16.mxu0 %v1299
    %1663 = vmatpush1.bf16.msra.mxu0 %v1298
    %1664 = vmatprep.subr.bf16.mxu0 %v1303
    %1665 = vmatpush1.bf16.msra.mxu0 %v1302
    %1666 = vmatprep.subr.bf16.mxu0 %v1307
    %1667 = vmatpush1.bf16.msra.mxu0 %v1306
    %1668 = vmatprep.subr.bf16.mxu0 %v1311
    %1669 = vmatpush1.bf16.msra.mxu0 %v1310
    %1670 = vmatprep.subr.bf16.mxu0 %v1315
    %1671 = vmatpush1.bf16.msra.mxu0 %v1314
    %1672 = vmatprep.subr.bf16.mxu0 %v1319
    %1673 = vmatpush1.bf16.msra.mxu0 %v1318
    %1674 = vmatprep.mubr.bf16.mxu0 %v463
    %1675 = vmatmul.mubr.bf16.gmra.mrb[0].mxu0 %v462
    %v1676 = vpop.f32.mrb[0].mxu0
    %v1677 = vadd.f32 %v665, %v1676
    %v1678 = vpop.f32.mrb[0].mxu0
    %v1679 = vadd.f32 %v669, %v1678
    %v1680 = vpop.f32.mrb[0].mxu0
    %v1681 = vpop.f32.mrb[0].mxu0
    %1682 = vdwg.mxu0
    %1683 = vmatprep.subr.bf16.mxu0 %v1323
    %1684 = vmatpush1.bf16.msra.mxu0 %v1322
    %1685 = vmatprep.subr.bf16.mxu0 %v1327
    %1686 = vmatpush1.bf16.msra.mxu0 %v1326
    %1687 = vmatprep.subr.bf16.mxu0 %v1331
    %1688 = vmatpush1.bf16.msra.mxu0 %v1330
    %1689 = vmatprep.subr.bf16.mxu0 %v1335
    %1690 = vmatpush1.bf16.msra.mxu0 %v1334
    %1691 = vmatprep.subr.bf16.mxu0 %v1339
    %1692 = vmatpush1.bf16.msra.mxu0 %v1338
    %1693 = vmatprep.subr.bf16.mxu0 %v1343
    %1694 = vmatpush1.bf16.msra.mxu0 %v1342
    %1695 = vmatprep.subr.bf16.mxu0 %v1347
    %1696 = vmatpush1.bf16.msra.mxu0 %v1346
    %1697 = vmatprep.subr.bf16.mxu0 %v1351
    %1698 = vmatpush1.bf16.msra.mxu0 %v1350
    %1699 = vmatprep.subr.bf16.mxu0 %v1355
    %1700 = vmatpush1.bf16.msra.mxu0 %v1354
    %1701 = vmatprep.subr.bf16.mxu0 %v1359
    %1702 = vmatpush1.bf16.msra.mxu0 %v1358
    %1703 = vmatprep.subr.bf16.mxu0 %v1363
    %1704 = vmatpush1.bf16.msra.mxu0 %v1362
    %1705 = vmatprep.subr.bf16.mxu0 %v1367
    %1706 = vmatpush1.bf16.msra.mxu0 %v1366
    %1707 = vmatprep.subr.bf16.mxu0 %v1371
    %1708 = vmatpush1.bf16.msra.mxu0 %v1370
    %1709 = vmatprep.subr.bf16.mxu0 %v1375
    %1710 = vmatpush1.bf16.msra.mxu0 %v1374
    %1711 = vmatprep.subr.bf16.mxu0 %v1379
    %1712 = vmatpush1.bf16.msra.mxu0 %v1378
    %1713 = vmatprep.subr.bf16.mxu0 %v1383
    %1714 = vmatpush1.bf16.msra.mxu0 %v1382
    %1715 = vmatprep.mubr.bf16.mxu0 %v465
    %1716 = vmatmul.mubr.bf16.gmra.mrb[0].mxu0 %v464
    %v1717 = vpop.f32.mrb[0].mxu0
    %v1718 = vadd.f32 %v1677, %v1717
    %v1719 = vpop.f32.mrb[0].mxu0
    %v1720 = vadd.f32 %v1679, %v1719
    %v1721 = vpop.f32.mrb[0].mxu0
    %v1722 = vpop.f32.mrb[0].mxu0
    %1723 = vdwg.mxu0
    %1724 = vmatprep.subr.bf16.mxu0 %v1387
    %1725 = vmatpush1.bf16.msra.mxu0 %v1386
    %1726 = vmatprep.subr.bf16.mxu0 %v1391
    %1727 = vmatpush1.bf16.msra.mxu0 %v1390
    %1728 = vmatprep.subr.bf16.mxu0 %v1395
    %1729 = vmatpush1.bf16.msra.mxu0 %v1394
    %1730 = vmatprep.subr.bf16.mxu0 %v1399
    %1731 = vmatpush1.bf16.msra.mxu0 %v1398
    %1732 = vmatprep.subr.bf16.mxu0 %v1403
    %1733 = vmatpush1.bf16.msra.mxu0 %v1402
    %1734 = vmatprep.subr.bf16.mxu0 %v1407
    %1735 = vmatpush1.bf16.msra.mxu0 %v1406
    %1736 = vmatprep.subr.bf16.mxu0 %v1411
    %1737 = vmatpush1.bf16.msra.mxu0 %v1410
    %1738 = vmatprep.subr.bf16.mxu0 %v1415
    %1739 = vmatpush1.bf16.msra.mxu0 %v1414
    %1740 = vmatprep.subr.bf16.mxu0 %v1419
    %1741 = vmatpush1.bf16.msra.mxu0 %v1418
    %1742 = vmatprep.subr.bf16.mxu0 %v1423
    %1743 = vmatpush1.bf16.msra.mxu0 %v1422
    %1744 = vmatprep.subr.bf16.mxu0 %v1427
    %1745 = vmatpush1.bf16.msra.mxu0 %v1426
    %1746 = vmatprep.subr.bf16.mxu0 %v1431
    %1747 = vmatpush1.bf16.msra.mxu0 %v1430
    %1748 = vmatprep.subr.bf16.mxu0 %v1435
    %1749 = vmatpush1.bf16.msra.mxu0 %v1434
    %1750 = vmatprep.subr.bf16.mxu0 %v1439
    %1751 = vmatpush1.bf16.msra.mxu0 %v1438
    %1752 = vmatprep.subr.bf16.mxu0 %v1443
    %1753 = vmatpush1.bf16.msra.mxu0 %v1442
    %1754 = vmatprep.subr.bf16.mxu0 %v1447
    %1755 = vmatpush1.bf16.msra.mxu0 %v1446
    %1756 = vmatprep.mubr.bf16.mxu0 %v467
    %1757 = vmatmul.mubr.bf16.gmra.mrb[0].mxu0 %v466
    %v1758 = vpop.f32.mrb[0].mxu0
    %v1759 = vadd.f32 %v1718, %v1758
    %v1760 = vpop.f32.mrb[0].mxu0
    %v1761 = vadd.f32 %v1720, %v1760
    %v1762 = vpop.f32.mrb[0].mxu0
    %v1763 = vpop.f32.mrb[0].mxu0
    %1764 = vdwg.mxu0
    %1765 = vmatprep.subr.bf16.mxu0 %v1261
    %1766 = vmatpush1.bf16.msra.mxu0 %v1260
    %1767 = vmatprep.subr.bf16.mxu0 %v1265
    %1768 = vmatpush1.bf16.msra.mxu0 %v1264
    %1769 = vmatprep.subr.bf16.mxu0 %v1269
    %1770 = vmatpush1.bf16.msra.mxu0 %v1268
    %1771 = vmatprep.subr.bf16.mxu0 %v1273
    %1772 = vmatpush1.bf16.msra.mxu0 %v1272
    %1773 = vmatprep.subr.bf16.mxu0 %v1277
    %1774 = vmatpush1.bf16.msra.mxu0 %v1276
    %1775 = vmatprep.subr.bf16.mxu0 %v1281
    %1776 = vmatpush1.bf16.msra.mxu0 %v1280
    %1777 = vmatprep.subr.bf16.mxu0 %v1285
    %1778 = vmatpush1.bf16.msra.mxu0 %v1284
    %1779 = vmatprep.subr.bf16.mxu0 %v1289
    %1780 = vmatpush1.bf16.msra.mxu0 %v1288
    %1781 = vmatprep.subr.bf16.mxu0 %v1293
    %1782 = vmatpush1.bf16.msra.mxu0 %v1292
    %1783 = vmatprep.subr.bf16.mxu0 %v1297
    %1784 = vmatpush1.bf16.msra.mxu0 %v1296
    %1785 = vmatprep.subr.bf16.mxu0 %v1301
    %1786 = vmatpush1.bf16.msra.mxu0 %v1300
    %1787 = vmatprep.subr.bf16.mxu0 %v1305
    %1788 = vmatpush1.bf16.msra.mxu0 %v1304
    %1789 = vmatprep.subr.bf16.mxu0 %v1309
    %1790 = vmatpush1.bf16.msra.mxu0 %v1308
    %1791 = vmatprep.subr.bf16.mxu0 %v1313
    %1792 = vmatpush1.bf16.msra.mxu0 %v1312
    %1793 = vmatprep.subr.bf16.mxu0 %v1317
    %1794 = vmatpush1.bf16.msra.mxu0 %v1316
    %1795 = vmatprep.subr.bf16.mxu0 %v1321
    %1796 = vmatpush1.bf16.msra.mxu0 %v1320
    %1797 = vmatprep.mubr.bf16.mxu0 %v463
    %1798 = vmatmul.mubr.bf16.gmra.mrb[0].mxu0 %v462
    %v1799 = vpop.f32.mrb[0].mxu0
    %v1800 = vadd.f32 %v673, %v1799
    %v1801 = vpop.f32.mrb[0].mxu0
    %v1802 = vadd.f32 %v677, %v1801
    %v1803 = vpop.f32.mrb[0].mxu0
    %v1804 = vpop.f32.mrb[0].mxu0
    %1805 = vdwg.mxu0
    %1806 = vmatprep.subr.bf16.mxu0 %v1325
    %1807 = vmatpush1.bf16.msra.mxu0 %v1324
    %1808 = vmatprep.subr.bf16.mxu0 %v1329
    %1809 = vmatpush1.bf16.msra.mxu0 %v1328
    %1810 = vmatprep.subr.bf16.mxu0 %v1333
    %1811 = vmatpush1.bf16.msra.mxu0 %v1332
    %1812 = vmatprep.subr.bf16.mxu0 %v1337
    %1813 = vmatpush1.bf16.msra.mxu0 %v1336
    %1814 = vmatprep.subr.bf16.mxu0 %v1341
    %1815 = vmatpush1.bf16.msra.mxu0 %v1340
    %1816 = vmatprep.subr.bf16.mxu0 %v1345
    %1817 = vmatpush1.bf16.msra.mxu0 %v1344
    %1818 = vmatprep.subr.bf16.mxu0 %v1349
    %1819 = vmatpush1.bf16.msra.mxu0 %v1348
    %1820 = vmatprep.subr.bf16.mxu0 %v1353
    %1821 = vmatpush1.bf16.msra.mxu0 %v1352
    %1822 = vmatprep.subr.bf16.mxu0 %v1357
    %1823 = vmatpush1.bf16.msra.mxu0 %v1356
    %1824 = vmatprep.subr.bf16.mxu0 %v1361
    %1825 = vmatpush1.bf16.msra.mxu0 %v1360
    %1826 = vmatprep.subr.bf16.mxu0 %v1365
    %1827 = vmatpush1.bf16.msra.mxu0 %v1364
    %1828 = vmatprep.subr.bf16.mxu0 %v1369
    %1829 = vmatpush1.bf16.msra.mxu0 %v1368
    %1830 = vmatprep.subr.bf16.mxu0 %v1373
    %1831 = vmatpush1.bf16.msra.mxu0 %v1372
    %1832 = vmatprep.subr.bf16.mxu0 %v1377
    %1833 = vmatpush1.bf16.msra.mxu0 %v1376
    %1834 = vmatprep.subr.bf16.mxu0 %v1381
    %1835 = vmatpush1.bf16.msra.mxu0 %v1380
    %1836 = vmatprep.subr.bf16.mxu0 %v1385
    %1837 = vmatpush1.bf16.msra.mxu0 %v1384
    %1838 = vmatprep.mubr.bf16.mxu0 %v465
    %1839 = vmatmul.mubr.bf16.gmra.mrb[0].mxu0 %v464
    %v1840 = vpop.f32.mrb[0].mxu0
    %v1841 = vadd.f32 %v1800, %v1840
    %v1842 = vpop.f32.mrb[0].mxu0
    %v1843 = vadd.f32 %v1802, %v1842
    %v1844 = vpop.f32.mrb[0].mxu0
    %v1845 = vpop.f32.mrb[0].mxu0
    %1846 = vdwg.mxu0
    %1847 = vmatprep.subr.bf16.mxu0 %v1389
    %1848 = vmatpush1.bf16.msra.mxu0 %v1388
    %1849 = vmatprep.subr.bf16.mxu0 %v1393
    %1850 = vmatpush1.bf16.msra.mxu0 %v1392
    %1851 = vmatprep.subr.bf16.mxu0 %v1397
    %1852 = vmatpush1.bf16.msra.mxu0 %v1396
    %1853 = vmatprep.subr.bf16.mxu0 %v1401
    %1854 = vmatpush1.bf16.msra.mxu0 %v1400
    %1855 = vmatprep.subr.bf16.mxu0 %v1405
    %1856 = vmatpush1.bf16.msra.mxu0 %v1404
    %1857 = vmatprep.subr.bf16.mxu0 %v1409
    %1858 = vmatpush1.bf16.msra.mxu0 %v1408
    %1859 = vmatprep.subr.bf16.mxu0 %v1413
    %1860 = vmatpush1.bf16.msra.mxu0 %v1412
    %1861 = vmatprep.subr.bf16.mxu0 %v1417
    %1862 = vmatpush1.bf16.msra.mxu0 %v1416
    %1863 = vmatprep.subr.bf16.mxu0 %v1421
    %1864 = vmatpush1.bf16.msra.mxu0 %v1420
    %1865 = vmatprep.subr.bf16.mxu0 %v1425
    %1866 = vmatpush1.bf16.msra.mxu0 %v1424
    %1867 = vmatprep.subr.bf16.mxu0 %v1429
    %1868 = vmatpush1.bf16.msra.mxu0 %v1428
    %1869 = vmatprep.subr.bf16.mxu0 %v1433
    %1870 = vmatpush1.bf16.msra.mxu0 %v1432
    %1871 = vmatprep.subr.bf16.mxu0 %v1437
    %1872 = vmatpush1.bf16.msra.mxu0 %v1436
    %1873 = vmatprep.subr.bf16.mxu0 %v1441
    %1874 = vmatpush1.bf16.msra.mxu0 %v1440
    %1875 = vmatprep.subr.bf16.mxu0 %v1445
    %1876 = vmatpush1.bf16.msra.mxu0 %v1444
    %1877 = vmatprep.subr.bf16.mxu0 %v1449
    %1878 = vmatpush1.bf16.msra.mxu0 %v1448
    %1879 = vmatprep.mubr.bf16.mxu0 %v467
    %1880 = vmatmul.mubr.bf16.gmra.mrb[0].mxu0 %v466
    %v1881 = vpop.f32.mrb[0].mxu0
    %v1882 = vadd.f32 %v1841, %v1881
    %v1883 = vpop.f32.mrb[0].mxu0
    %v1884 = vadd.f32 %v1843, %v1883
    %v1885 = vpop.f32.mrb[0].mxu0
    %v1886 = vpop.f32.mrb[0].mxu0
    %1887 = vdwg.mxu0
    %v1888 = vld [vmem:[%s6] sm:$0xff]
    %v1889 = vld [vmem:[%s6 + $0x8] sm:$0xf]
    %v1892 = vcombine.high %v1888, %v1888
    %v1894 = vunpack.c.l.s4 1983009808
    %v1895 = vunpack.c.0.s8 %v1894
    %v1896 = vlaneseq
    %v1897 = vshrl.u32 %v1896, 7
    %v1898 = vsub.s32 %v1895, %v1897
    %v1899 = vrot.slane %v1888, %v1898
    %v1901 = vunpack.c.l.s4 1983009808
    %v1902 = vunpack.c.0.s8 %v1901
    %v1903 = vlaneseq
    %v1904 = vshrl.u32 %v1903, 7
    %v1905 = vsub.s32 %v1902, %v1904
    %v1906 = vrot.slane %v1892, %v1905
    %v1907 = vcombine.high %v1899, %v1899
    %v1908 = vcombine.high %v1906, %v1906
    %v1910 = vunpack.c.l.s4 1983009808
    %v1911 = vunpack.c.0.s8 %v1910
    %v1912 = vlaneseq
    %v1913 = vshrl.u32 %v1912, 7
    %v1914 = vsub.s32 %v1911, %v1913
    %v1915 = vrot.slane %v1889, %v1914
    %v1916 = vcombine.high %v1915, %v1915
    %v1923 = vpack.c.bf16 %v1899, %v1899
    %v1924 = vpack.c.bf16 %v1907, %v1907
    %v1925 = vpack.c.bf16 %v1906, %v1906
    %v1926 = vpack.c.bf16 %v1908, %v1908
    %v1927 = vpack.c.bf16 %v1915, %v1915
    %v1928 = vpack.c.bf16 %v1916, %v1916
    %v1929 = vld [vmem:[#allocation7] sm:$0xff]
    %v1930 = vld [vmem:[#allocation7 + $0x8] sm:$0xff]
    %v1931 = vld [vmem:[#allocation7 + $0x10] sm:$0xff]
    %v1932 = vld [vmem:[#allocation7 + $0x18] sm:$0xff]
    %v1933 = vld [vmem:[#allocation7 + $0x20] sm:$0xff]
    %v1934 = vld [vmem:[#allocation7 + $0x28] sm:$0xff]
    %v1935 = vld [vmem:[#allocation7 + $0x30] sm:$0xff]
    %v1936 = vld [vmem:[#allocation7 + $0x38] sm:$0xff]
    %v1937 = vld [vmem:[#allocation7 + $0x40] sm:$0xff]
    %v1938 = vld [vmem:[#allocation7 + $0x48] sm:$0xff]
    %v1939 = vld [vmem:[#allocation7 + $0x50] sm:$0xff]
    %v1940 = vld [vmem:[#allocation7 + $0x58] sm:$0xff]
    %v1941 = vld [vmem:[#allocation7 + $0x60] sm:$0xff]
    %v1942 = vld [vmem:[#allocation7 + $0x68] sm:$0xff]
    %v1943 = vld [vmem:[#allocation7 + $0x70] sm:$0xff]
    %v1944 = vld [vmem:[#allocation7 + $0x78] sm:$0xff]
    %v1945 = vld [vmem:[#allocation7 + $0x80] sm:$0xff]
    %v1946 = vld [vmem:[#allocation7 + $0x88] sm:$0xff]
    %v1947 = vld [vmem:[#allocation7 + $0x90] sm:$0xff]
    %v1948 = vld [vmem:[#allocation7 + $0x98] sm:$0xff]
    %v1949 = vld [vmem:[#allocation7 + $0xa0] sm:$0xff]
    %v1950 = vld [vmem:[#allocation7 + $0xa8] sm:$0xff]
    %v1951 = vld [vmem:[#allocation7 + $0xb0] sm:$0xff]
    %v1952 = vld [vmem:[#allocation7 + $0xb8] sm:$0xff]
    %v1953 = vld [vmem:[#allocation7 + $0xc0] sm:$0xff]
    %v1954 = vld [vmem:[#allocation7 + $0xc8] sm:$0xff]
    %v1955 = vld [vmem:[#allocation7 + $0xd0] sm:$0xff]
    %v1956 = vld [vmem:[#allocation7 + $0xd8] sm:$0xff]
    %v1957 = vld [vmem:[#allocation7 + $0xe0] sm:$0xff]
    %v1958 = vld [vmem:[#allocation7 + $0xe8] sm:$0xff]
    %v1959 = vld [vmem:[#allocation7 + $0xf0] sm:$0xff]
    %v1960 = vld [vmem:[#allocation7 + $0xf8] sm:$0xff]
    %v1961 = vld [vmem:[#allocation7 + $0x100] sm:$0xff]
    %v1962 = vld [vmem:[#allocation7 + $0x108] sm:$0xff]
    %v1963 = vld [vmem:[#allocation7 + $0x110] sm:$0xff]
    %v1964 = vld [vmem:[#allocation7 + $0x118] sm:$0xff]
    %v1965 = vld [vmem:[#allocation7 + $0x120] sm:$0xff]
    %v1966 = vld [vmem:[#allocation7 + $0x128] sm:$0xff]
    %v1967 = vld [vmem:[#allocation7 + $0x130] sm:$0xff]
    %v1968 = vld [vmem:[#allocation7 + $0x138] sm:$0xff]
    %v1969 = vld [vmem:[#allocation7 + $0x140] sm:$0xff]
    %v1970 = vld [vmem:[#allocation7 + $0x148] sm:$0xff]
    %v1971 = vld [vmem:[#allocation7 + $0x150] sm:$0xff]
    %v1972 = vld [vmem:[#allocation7 + $0x158] sm:$0xff]
    %v1973 = vld [vmem:[#allocation7 + $0x160] sm:$0xff]
    %v1974 = vld [vmem:[#allocation7 + $0x168] sm:$0xff]
    %v1975 = vld [vmem:[#allocation7 + $0x170] sm:$0xff]
    %v1976 = vld [vmem:[#allocation7 + $0x178] sm:$0xff]
    %v1977 = vld [vmem:[#allocation7 + $0x180] sm:$0xff]
    %v1978 = vld [vmem:[#allocation7 + $0x188] sm:$0xff]
    %v1979 = vld [vmem:[#allocation7 + $0x190] sm:$0xff]
    %v1980 = vld [vmem:[#allocation7 + $0x198] sm:$0xff]
    %v1981 = vld [vmem:[#allocation7 + $0x1a0] sm:$0xff]
    %v1982 = vld [vmem:[#allocation7 + $0x1a8] sm:$0xff]
    %v1983 = vld [vmem:[#allocation7 + $0x1b0] sm:$0xff]
    %v1984 = vld [vmem:[#allocation7 + $0x1b8] sm:$0xff]
    %v1985 = vld [vmem:[#allocation7 + $0x1c0] sm:$0xff]
    %v1986 = vld [vmem:[#allocation7 + $0x1c8] sm:$0xff]
    %v1987 = vld [vmem:[#allocation7 + $0x1d0] sm:$0xff]
    %v1988 = vld [vmem:[#allocation7 + $0x1d8] sm:$0xff]
    %v1989 = vld [vmem:[#allocation7 + $0x1e0] sm:$0xff]
    %v1990 = vld [vmem:[#allocation7 + $0x1e8] sm:$0xff]
    %v1991 = vld [vmem:[#allocation7 + $0x1f0] sm:$0xff]
    %v1992 = vld [vmem:[#allocation7 + $0x1f8] sm:$0xff]
    %v1993 = vld [vmem:[#allocation7 + $0x200] sm:$0xff]
    %v1994 = vld [vmem:[#allocation7 + $0x208] sm:$0xff]
    %v1995 = vld [vmem:[#allocation7 + $0x210] sm:$0xff]
    %v1996 = vld [vmem:[#allocation7 + $0x218] sm:$0xff]
    %v1997 = vld [vmem:[#allocation7 + $0x220] sm:$0xff]
    %v1998 = vld [vmem:[#allocation7 + $0x228] sm:$0xff]
    %v1999 = vld [vmem:[#allocation7 + $0x230] sm:$0xff]
    %v2000 = vld [vmem:[#allocation7 + $0x238] sm:$0xff]
    %v2001 = vld [vmem:[#allocation7 + $0x240] sm:$0xff]
    %v2002 = vld [vmem:[#allocation7 + $0x248] sm:$0xff]
    %v2003 = vld [vmem:[#allocation7 + $0x250] sm:$0xff]
    %v2004 = vld [vmem:[#allocation7 + $0x258] sm:$0xff]
    %v2005 = vld [vmem:[#allocation7 + $0x260] sm:$0xff]
    %v2006 = vld [vmem:[#allocation7 + $0x268] sm:$0xff]
    %v2007 = vld [vmem:[#allocation7 + $0x270] sm:$0xff]
    %v2008 = vld [vmem:[#allocation7 + $0x278] sm:$0xff]
    %v2009 = vld [vmem:[#allocation7 + $0x280] sm:$0xff]
    %v2010 = vld [vmem:[#allocation7 + $0x288] sm:$0xff]
    %v2011 = vld [vmem:[#allocation7 + $0x290] sm:$0xff]
    %v2012 = vld [vmem:[#allocation7 + $0x298] sm:$0xff]
    %v2013 = vld [vmem:[#allocation7 + $0x2a0] sm:$0xff]
    %v2014 = vld [vmem:[#allocation7 + $0x2a8] sm:$0xff]
    %v2015 = vld [vmem:[#allocation7 + $0x2b0] sm:$0xff]
    %v2016 = vld [vmem:[#allocation7 + $0x2b8] sm:$0xff]
    %v2017 = vld [vmem:[#allocation7 + $0x2c0] sm:$0xff]
    %v2018 = vld [vmem:[#allocation7 + $0x2c8] sm:$0xff]
    %v2019 = vld [vmem:[#allocation7 + $0x2d0] sm:$0xff]
    %v2020 = vld [vmem:[#allocation7 + $0x2d8] sm:$0xff]
    %v2021 = vld [vmem:[#allocation7 + $0x2e0] sm:$0xff]
    %v2022 = vld [vmem:[#allocation7 + $0x2e8] sm:$0xff]
    %v2023 = vld [vmem:[#allocation7 + $0x2f0] sm:$0xff]
    %v2024 = vld [vmem:[#allocation7 + $0x2f8] sm:$0xff]
    %v2025 = vld [vmem:[#allocation7 + $0x300] sm:$0xff]
    %v2026 = vld [vmem:[#allocation7 + $0x308] sm:$0xff]
    %v2027 = vld [vmem:[#allocation7 + $0x310] sm:$0xff]
    %v2028 = vld [vmem:[#allocation7 + $0x318] sm:$0xff]
    %v2029 = vld [vmem:[#allocation7 + $0x320] sm:$0xff]
    %v2030 = vld [vmem:[#allocation7 + $0x328] sm:$0xff]
    %v2031 = vld [vmem:[#allocation7 + $0x330] sm:$0xff]
    %v2032 = vld [vmem:[#allocation7 + $0x338] sm:$0xff]
    %v2033 = vld [vmem:[#allocation7 + $0x340] sm:$0xff]
    %v2034 = vld [vmem:[#allocation7 + $0x348] sm:$0xff]
    %v2035 = vld [vmem:[#allocation7 + $0x350] sm:$0xff]
    %v2036 = vld [vmem:[#allocation7 + $0x358] sm:$0xff]
    %v2037 = vld [vmem:[#allocation7 + $0x360] sm:$0xff]
    %v2038 = vld [vmem:[#allocation7 + $0x368] sm:$0xff]
    %v2039 = vld [vmem:[#allocation7 + $0x370] sm:$0xff]
    %v2040 = vld [vmem:[#allocation7 + $0x378] sm:$0xff]
    %v2041 = vld [vmem:[#allocation7 + $0x380] sm:$0xff]
    %v2042 = vld [vmem:[#allocation7 + $0x388] sm:$0xff]
    %v2043 = vld [vmem:[#allocation7 + $0x390] sm:$0xff]
    %v2044 = vld [vmem:[#allocation7 + $0x398] sm:$0xff]
    %v2045 = vld [vmem:[#allocation7 + $0x3a0] sm:$0xff]
    %v2046 = vld [vmem:[#allocation7 + $0x3a8] sm:$0xff]
    %v2047 = vld [vmem:[#allocation7 + $0x3b0] sm:$0xff]
    %v2048 = vld [vmem:[#allocation7 + $0x3b8] sm:$0xff]
    %v2049 = vld [vmem:[#allocation7 + $0x3c0] sm:$0xff]
    %v2050 = vld [vmem:[#allocation7 + $0x3c8] sm:$0xff]
    %v2051 = vld [vmem:[#allocation7 + $0x3d0] sm:$0xff]
    %v2052 = vld [vmem:[#allocation7 + $0x3d8] sm:$0xff]
    %v2053 = vld [vmem:[#allocation7 + $0x3e0] sm:$0xff]
    %v2054 = vld [vmem:[#allocation7 + $0x3e8] sm:$0xff]
    %v2055 = vld [vmem:[#allocation7 + $0x3f0] sm:$0xff]
    %v2056 = vld [vmem:[#allocation7 + $0x3f8] sm:$0xff]
    %v2057 = vld [vmem:[#allocation7 + $0x400] sm:$0xff]
    %v2058 = vld [vmem:[#allocation7 + $0x408] sm:$0xff]
    %v2059 = vld [vmem:[#allocation7 + $0x410] sm:$0xff]
    %v2060 = vld [vmem:[#allocation7 + $0x418] sm:$0xff]
    %v2061 = vld [vmem:[#allocation7 + $0x420] sm:$0xff]
    %v2062 = vld [vmem:[#allocation7 + $0x428] sm:$0xff]
    %v2063 = vld [vmem:[#allocation7 + $0x430] sm:$0xff]
    %v2064 = vld [vmem:[#allocation7 + $0x438] sm:$0xff]
    %v2065 = vld [vmem:[#allocation7 + $0x440] sm:$0xff]
    %v2066 = vld [vmem:[#allocation7 + $0x448] sm:$0xff]
    %v2067 = vld [vmem:[#allocation7 + $0x450] sm:$0xff]
    %v2068 = vld [vmem:[#allocation7 + $0x458] sm:$0xff]
    %v2069 = vld [vmem:[#allocation7 + $0x460] sm:$0xff]
    %v2070 = vld [vmem:[#allocation7 + $0x468] sm:$0xff]
    %v2071 = vld [vmem:[#allocation7 + $0x470] sm:$0xff]
    %v2072 = vld [vmem:[#allocation7 + $0x478] sm:$0xff]
    %v2073 = vld [vmem:[#allocation7 + $0x480] sm:$0xff]
    %v2074 = vld [vmem:[#allocation7 + $0x488] sm:$0xff]
    %v2075 = vld [vmem:[#allocation7 + $0x490] sm:$0xff]
    %v2076 = vld [vmem:[#allocation7 + $0x498] sm:$0xff]
    %v2077 = vld [vmem:[#allocation7 + $0x4a0] sm:$0xff]
    %v2078 = vld [vmem:[#allocation7 + $0x4a8] sm:$0xff]
    %v2079 = vld [vmem:[#allocation7 + $0x4b0] sm:$0xff]
    %v2080 = vld [vmem:[#allocation7 + $0x4b8] sm:$0xff]
    %v2081 = vld [vmem:[#allocation7 + $0x4c0] sm:$0xff]
    %v2082 = vld [vmem:[#allocation7 + $0x4c8] sm:$0xff]
    %v2083 = vld [vmem:[#allocation7 + $0x4d0] sm:$0xff]
    %v2084 = vld [vmem:[#allocation7 + $0x4d8] sm:$0xff]
    %v2085 = vld [vmem:[#allocation7 + $0x4e0] sm:$0xff]
    %v2086 = vld [vmem:[#allocation7 + $0x4e8] sm:$0xff]
    %v2087 = vld [vmem:[#allocation7 + $0x4f0] sm:$0xff]
    %v2088 = vld [vmem:[#allocation7 + $0x4f8] sm:$0xff]
    %v2089 = vld [vmem:[#allocation7 + $0x500] sm:$0xff]
    %v2090 = vld [vmem:[#allocation7 + $0x508] sm:$0xff]
    %v2091 = vld [vmem:[#allocation7 + $0x510] sm:$0xff]
    %v2092 = vld [vmem:[#allocation7 + $0x518] sm:$0xff]
    %v2093 = vld [vmem:[#allocation7 + $0x520] sm:$0xff]
    %v2094 = vld [vmem:[#allocation7 + $0x528] sm:$0xff]
    %v2095 = vld [vmem:[#allocation7 + $0x530] sm:$0xff]
    %v2096 = vld [vmem:[#allocation7 + $0x538] sm:$0xff]
    %v2097 = vld [vmem:[#allocation7 + $0x540] sm:$0xff]
    %v2098 = vld [vmem:[#allocation7 + $0x548] sm:$0xff]
    %v2099 = vld [vmem:[#allocation7 + $0x550] sm:$0xff]
    %v2100 = vld [vmem:[#allocation7 + $0x558] sm:$0xff]
    %v2101 = vld [vmem:[#allocation7 + $0x560] sm:$0xff]
    %v2102 = vld [vmem:[#allocation7 + $0x568] sm:$0xff]
    %v2103 = vld [vmem:[#allocation7 + $0x570] sm:$0xff]
    %v2104 = vld [vmem:[#allocation7 + $0x578] sm:$0xff]
    %v2105 = vld [vmem:[#allocation7 + $0x580] sm:$0xff]
    %v2106 = vld [vmem:[#allocation7 + $0x588] sm:$0xff]
    %v2107 = vld [vmem:[#allocation7 + $0x590] sm:$0xff]
    %v2108 = vld [vmem:[#allocation7 + $0x598] sm:$0xff]
    %v2109 = vld [vmem:[#allocation7 + $0x5a0] sm:$0xff]
    %v2110 = vld [vmem:[#allocation7 + $0x5a8] sm:$0xff]
    %v2111 = vld [vmem:[#allocation7 + $0x5b0] sm:$0xff]
    %v2112 = vld [vmem:[#allocation7 + $0x5b8] sm:$0xff]
    %v2113 = vld [vmem:[#allocation7 + $0x5c0] sm:$0xff]
    %v2114 = vld [vmem:[#allocation7 + $0x5c8] sm:$0xff]
    %v2115 = vld [vmem:[#allocation7 + $0x5d0] sm:$0xff]
    %v2116 = vld [vmem:[#allocation7 + $0x5d8] sm:$0xff]
    %v2117 = vld [vmem:[#allocation7 + $0x5e0] sm:$0xff]
    %v2118 = vld [vmem:[#allocation7 + $0x5e8] sm:$0xff]
    %v2119 = vld [vmem:[#allocation7 + $0x5f0] sm:$0xff]
    %v2120 = vld [vmem:[#allocation7 + $0x5f8] sm:$0xff]
    %v2121 = vld [vmem:[%s8] sm:$0xf]
    %v2123 = vlaneseq
    %v2124 = vshrl.u32 %v2123, 7
    %v2125 = vsub.s32 0, %v2124
    %v2126 = vrot.slane %v2121, %v2125
    %v2127 = vlaneseq
    %v2128 = vshrl.u32 %v2127, 7
    %v2129 = vsub.s32 1, %v2128
    %v2130 = vrot.slane %v2121, %v2129
    %v2131 = vlaneseq
    %v2132 = vshrl.u32 %v2131, 7
    %v2133 = vsub.s32 2, %v2132
    %v2134 = vrot.slane %v2121, %v2133
    %v2135 = vlaneseq
    %v2136 = vshrl.u32 %v2135, 7
    %v2137 = vsub.s32 3, %v2136
    %v2138 = vrot.slane %v2121, %v2137
    %v2335 = vunpack.c.l.b16 %v1929
    %v2336 = vunpack.c.h.b16 %v1929
    %v2337 = vunpack.c.l.b16 %v1930
    %v2338 = vunpack.c.h.b16 %v1930
    %v2339 = vunpack.c.l.b16 %v1931
    %v2340 = vunpack.c.h.b16 %v1931
    %v2341 = vunpack.c.l.b16 %v1932
    %v2342 = vunpack.c.h.b16 %v1932
    %v2343 = vunpack.c.l.b16 %v1933
    %v2344 = vunpack.c.h.b16 %v1933
    %v2345 = vunpack.c.l.b16 %v1934
    %v2346 = vunpack.c.h.b16 %v1934
    %v2347 = vunpack.c.l.b16 %v1935
    %v2348 = vunpack.c.h.b16 %v1935
    %v2349 = vunpack.c.l.b16 %v1936
    %v2350 = vunpack.c.h.b16 %v1936
    %v2351 = vunpack.c.l.b16 %v1937
    %v2352 = vunpack.c.h.b16 %v1937
    %v2353 = vunpack.c.l.b16 %v1938
    %v2354 = vunpack.c.h.b16 %v1938
    %v2355 = vunpack.c.l.b16 %v1939
    %v2356 = vunpack.c.h.b16 %v1939
    %v2357 = vunpack.c.l.b16 %v1940
    %v2358 = vunpack.c.h.b16 %v1940
    %v2359 = vunpack.c.l.b16 %v1941
    %v2360 = vunpack.c.h.b16 %v1941
    %v2361 = vunpack.c.l.b16 %v1942
    %v2362 = vunpack.c.h.b16 %v1942
    %v2363 = vunpack.c.l.b16 %v1943
    %v2364 = vunpack.c.h.b16 %v1943
    %v2365 = vunpack.c.l.b16 %v1944
    %v2366 = vunpack.c.h.b16 %v1944
    %v2367 = vunpack.c.l.b16 %v1945
    %v2368 = vunpack.c.h.b16 %v1945
    %v2369 = vunpack.c.l.b16 %v1946
    %v2370 = vunpack.c.h.b16 %v1946
    %v2371 = vunpack.c.l.b16 %v1947
    %v2372 = vunpack.c.h.b16 %v1947
    %v2373 = vunpack.c.l.b16 %v1948
    %v2374 = vunpack.c.h.b16 %v1948
    %v2375 = vunpack.c.l.b16 %v1949
    %v2376 = vunpack.c.h.b16 %v1949
    %v2377 = vunpack.c.l.b16 %v1950
    %v2378 = vunpack.c.h.b16 %v1950
    %v2379 = vunpack.c.l.b16 %v1951
    %v2380 = vunpack.c.h.b16 %v1951
    %v2381 = vunpack.c.l.b16 %v1952
    %v2382 = vunpack.c.h.b16 %v1952
    %v2383 = vunpack.c.l.b16 %v1953
    %v2384 = vunpack.c.h.b16 %v1953
    %v2385 = vunpack.c.l.b16 %v1954
    %v2386 = vunpack.c.h.b16 %v1954
    %v2387 = vunpack.c.l.b16 %v1955
    %v2388 = vunpack.c.h.b16 %v1955
    %v2389 = vunpack.c.l.b16 %v1956
    %v2390 = vunpack.c.h.b16 %v1956
    %v2391 = vunpack.c.l.b16 %v1957
    %v2392 = vunpack.c.h.b16 %v1957
    %v2393 = vunpack.c.l.b16 %v1958
    %v2394 = vunpack.c.h.b16 %v1958
    %v2395 = vunpack.c.l.b16 %v1959
    %v2396 = vunpack.c.h.b16 %v1959
    %v2397 = vunpack.c.l.b16 %v1960
    %v2398 = vunpack.c.h.b16 %v1960
    %v2399 = vunpack.c.l.b16 %v1961
    %v2400 = vunpack.c.h.b16 %v1961
    %v2401 = vunpack.c.l.b16 %v1962
    %v2402 = vunpack.c.h.b16 %v1962
    %v2403 = vunpack.c.l.b16 %v1963
    %v2404 = vunpack.c.h.b16 %v1963
    %v2405 = vunpack.c.l.b16 %v1964
    %v2406 = vunpack.c.h.b16 %v1964
    %v2407 = vunpack.c.l.b16 %v1965
    %v2408 = vunpack.c.h.b16 %v1965
    %v2409 = vunpack.c.l.b16 %v1966
    %v2410 = vunpack.c.h.b16 %v1966
    %v2411 = vunpack.c.l.b16 %v1967
    %v2412 = vunpack.c.h.b16 %v1967
    %v2413 = vunpack.c.l.b16 %v1968
    %v2414 = vunpack.c.h.b16 %v1968
    %v2415 = vunpack.c.l.b16 %v1969
    %v2416 = vunpack.c.h.b16 %v1969
    %v2417 = vunpack.c.l.b16 %v1970
    %v2418 = vunpack.c.h.b16 %v1970
    %v2419 = vunpack.c.l.b16 %v1971
    %v2420 = vunpack.c.h.b16 %v1971
    %v2421 = vunpack.c.l.b16 %v1972
    %v2422 = vunpack.c.h.b16 %v1972
    %v2423 = vunpack.c.l.b16 %v1973
    %v2424 = vunpack.c.h.b16 %v1973
    %v2425 = vunpack.c.l.b16 %v1974
    %v2426 = vunpack.c.h.b16 %v1974
    %v2427 = vunpack.c.l.b16 %v1975
    %v2428 = vunpack.c.h.b16 %v1975
    %v2429 = vunpack.c.l.b16 %v1976
    %v2430 = vunpack.c.h.b16 %v1976
    %v2431 = vunpack.c.l.b16 %v1977
    %v2432 = vunpack.c.h.b16 %v1977
    %v2433 = vunpack.c.l.b16 %v1978
    %v2434 = vunpack.c.h.b16 %v1978
    %v2435 = vunpack.c.l.b16 %v1979
    %v2436 = vunpack.c.h.b16 %v1979
    %v2437 = vunpack.c.l.b16 %v1980
    %v2438 = vunpack.c.h.b16 %v1980
    %v2439 = vunpack.c.l.b16 %v1981
    %v2440 = vunpack.c.h.b16 %v1981
    %v2441 = vunpack.c.l.b16 %v1982
    %v2442 = vunpack.c.h.b16 %v1982
    %v2443 = vunpack.c.l.b16 %v1983
    %v2444 = vunpack.c.h.b16 %v1983
    %v2445 = vunpack.c.l.b16 %v1984
    %v2446 = vunpack.c.h.b16 %v1984
    %v2447 = vunpack.c.l.b16 %v1985
    %v2448 = vunpack.c.h.b16 %v1985
    %v2449 = vunpack.c.l.b16 %v1986
    %v2450 = vunpack.c.h.b16 %v1986
    %v2451 = vunpack.c.l.b16 %v1987
    %v2452 = vunpack.c.h.b16 %v1987
    %v2453 = vunpack.c.l.b16 %v1988
    %v2454 = vunpack.c.h.b16 %v1988
    %v2455 = vunpack.c.l.b16 %v1989
    %v2456 = vunpack.c.h.b16 %v1989
    %v2457 = vunpack.c.l.b16 %v1990
    %v2458 = vunpack.c.h.b16 %v1990
    %v2459 = vunpack.c.l.b16 %v1991
    %v2460 = vunpack.c.h.b16 %v1991
    %v2461 = vunpack.c.l.b16 %v1992
    %v2462 = vunpack.c.h.b16 %v1992
    %v2463 = vunpack.c.l.b16 %v1993
    %v2464 = vunpack.c.h.b16 %v1993
    %v2465 = vunpack.c.l.b16 %v1994
    %v2466 = vunpack.c.h.b16 %v1994
    %v2467 = vunpack.c.l.b16 %v1995
    %v2468 = vunpack.c.h.b16 %v1995
    %v2469 = vunpack.c.l.b16 %v1996
    %v2470 = vunpack.c.h.b16 %v1996
    %v2471 = vunpack.c.l.b16 %v1997
    %v2472 = vunpack.c.h.b16 %v1997
    %v2473 = vunpack.c.l.b16 %v1998
    %v2474 = vunpack.c.h.b16 %v1998
    %v2475 = vunpack.c.l.b16 %v1999
    %v2476 = vunpack.c.h.b16 %v1999
    %v2477 = vunpack.c.l.b16 %v2000
    %v2478 = vunpack.c.h.b16 %v2000
    %v2479 = vunpack.c.l.b16 %v2001
    %v2480 = vunpack.c.h.b16 %v2001
    %v2481 = vunpack.c.l.b16 %v2002
    %v2482 = vunpack.c.h.b16 %v2002
    %v2483 = vunpack.c.l.b16 %v2003
    %v2484 = vunpack.c.h.b16 %v2003
    %v2485 = vunpack.c.l.b16 %v2004
    %v2486 = vunpack.c.h.b16 %v2004
    %v2487 = vunpack.c.l.b16 %v2005
    %v2488 = vunpack.c.h.b16 %v2005
    %v2489 = vunpack.c.l.b16 %v2006
    %v2490 = vunpack.c.h.b16 %v2006
    %v2491 = vunpack.c.l.b16 %v2007
    %v2492 = vunpack.c.h.b16 %v2007
    %v2493 = vunpack.c.l.b16 %v2008
    %v2494 = vunpack.c.h.b16 %v2008
    %v2495 = vunpack.c.l.b16 %v2009
    %v2496 = vunpack.c.h.b16 %v2009
    %v2497 = vunpack.c.l.b16 %v2010
    %v2498 = vunpack.c.h.b16 %v2010
    %v2499 = vunpack.c.l.b16 %v2011
    %v2500 = vunpack.c.h.b16 %v2011
    %v2501 = vunpack.c.l.b16 %v2012
    %v2502 = vunpack.c.h.b16 %v2012
    %v2503 = vunpack.c.l.b16 %v2013
    %v2504 = vunpack.c.h.b16 %v2013
    %v2505 = vunpack.c.l.b16 %v2014
    %v2506 = vunpack.c.h.b16 %v2014
    %v2507 = vunpack.c.l.b16 %v2015
    %v2508 = vunpack.c.h.b16 %v2015
    %v2509 = vunpack.c.l.b16 %v2016
    %v2510 = vunpack.c.h.b16 %v2016
    %v2511 = vunpack.c.l.b16 %v2017
    %v2512 = vunpack.c.h.b16 %v2017
    %v2513 = vunpack.c.l.b16 %v2018
    %v2514 = vunpack.c.h.b16 %v2018
    %v2515 = vunpack.c.l.b16 %v2019
    %v2516 = vunpack.c.h.b16 %v2019
    %v2517 = vunpack.c.l.b16 %v2020
    %v2518 = vunpack.c.h.b16 %v2020
    %v2519 = vunpack.c.l.b16 %v2021
    %v2520 = vunpack.c.h.b16 %v2021
    %v2521 = vunpack.c.l.b16 %v2022
    %v2522 = vunpack.c.h.b16 %v2022
    %v2523 = vunpack.c.l.b16 %v2023
    %v2524 = vunpack.c.h.b16 %v2023
    %v2525 = vunpack.c.l.b16 %v2024
    %v2526 = vunpack.c.h.b16 %v2024
    %v2527 = vunpack.c.l.b16 %v2025
    %v2528 = vunpack.c.h.b16 %v2025
    %v2529 = vunpack.c.l.b16 %v2026
    %v2530 = vunpack.c.h.b16 %v2026
    %v2531 = vunpack.c.l.b16 %v2027
    %v2532 = vunpack.c.h.b16 %v2027
    %v2533 = vunpack.c.l.b16 %v2028
    %v2534 = vunpack.c.h.b16 %v2028
    %v2535 = vunpack.c.l.b16 %v2029
    %v2536 = vunpack.c.h.b16 %v2029
    %v2537 = vunpack.c.l.b16 %v2030
    %v2538 = vunpack.c.h.b16 %v2030
    %v2539 = vunpack.c.l.b16 %v2031
    %v2540 = vunpack.c.h.b16 %v2031
    %v2541 = vunpack.c.l.b16 %v2032
    %v2542 = vunpack.c.h.b16 %v2032
    %v2543 = vunpack.c.l.b16 %v2033
    %v2544 = vunpack.c.h.b16 %v2033
    %v2545 = vunpack.c.l.b16 %v2034
    %v2546 = vunpack.c.h.b16 %v2034
    %v2547 = vunpack.c.l.b16 %v2035
    %v2548 = vunpack.c.h.b16 %v2035
    %v2549 = vunpack.c.l.b16 %v2036
    %v2550 = vunpack.c.h.b16 %v2036
    %v2551 = vunpack.c.l.b16 %v2037
    %v2552 = vunpack.c.h.b16 %v2037
    %v2553 = vunpack.c.l.b16 %v2038
    %v2554 = vunpack.c.h.b16 %v2038
    %v2555 = vunpack.c.l.b16 %v2039
    %v2556 = vunpack.c.h.b16 %v2039
    %v2557 = vunpack.c.l.b16 %v2040
    %v2558 = vunpack.c.h.b16 %v2040
    %v2559 = vunpack.c.l.b16 %v2041
    %v2560 = vunpack.c.h.b16 %v2041
    %v2561 = vunpack.c.l.b16 %v2042
    %v2562 = vunpack.c.h.b16 %v2042
    %v2563 = vunpack.c.l.b16 %v2043
    %v2564 = vunpack.c.h.b16 %v2043
    %v2565 = vunpack.c.l.b16 %v2044
    %v2566 = vunpack.c.h.b16 %v2044
    %v2567 = vunpack.c.l.b16 %v2045
    %v2568 = vunpack.c.h.b16 %v2045
    %v2569 = vunpack.c.l.b16 %v2046
    %v2570 = vunpack.c.h.b16 %v2046
    %v2571 = vunpack.c.l.b16 %v2047
    %v2572 = vunpack.c.h.b16 %v2047
    %v2573 = vunpack.c.l.b16 %v2048
    %v2574 = vunpack.c.h.b16 %v2048
    %v2575 = vunpack.c.l.b16 %v2049
    %v2576 = vunpack.c.h.b16 %v2049
    %v2577 = vunpack.c.l.b16 %v2050
    %v2578 = vunpack.c.h.b16 %v2050
    %v2579 = vunpack.c.l.b16 %v2051
    %v2580 = vunpack.c.h.b16 %v2051
    %v2581 = vunpack.c.l.b16 %v2052
    %v2582 = vunpack.c.h.b16 %v2052
    %v2583 = vunpack.c.l.b16 %v2053
    %v2584 = vunpack.c.h.b16 %v2053
    %v2585 = vunpack.c.l.b16 %v2054
    %v2586 = vunpack.c.h.b16 %v2054
    %v2587 = vunpack.c.l.b16 %v2055
    %v2588 = vunpack.c.h.b16 %v2055
    %v2589 = vunpack.c.l.b16 %v2056
    %v2590 = vunpack.c.h.b16 %v2056
    %v2591 = vunpack.c.l.b16 %v2057
    %v2592 = vunpack.c.h.b16 %v2057
    %v2593 = vunpack.c.l.b16 %v2058
    %v2594 = vunpack.c.h.b16 %v2058
    %v2595 = vunpack.c.l.b16 %v2059
    %v2596 = vunpack.c.h.b16 %v2059
    %v2597 = vunpack.c.l.b16 %v2060
    %v2598 = vunpack.c.h.b16 %v2060
    %v2599 = vunpack.c.l.b16 %v2061
    %v2600 = vunpack.c.h.b16 %v2061
    %v2601 = vunpack.c.l.b16 %v2062
    %v2602 = vunpack.c.h.b16 %v2062
    %v2603 = vunpack.c.l.b16 %v2063
    %v2604 = vunpack.c.h.b16 %v2063
    %v2605 = vunpack.c.l.b16 %v2064
    %v2606 = vunpack.c.h.b16 %v2064
    %v2607 = vunpack.c.l.b16 %v2065
    %v2608 = vunpack.c.h.b16 %v2065
    %v2609 = vunpack.c.l.b16 %v2066
    %v2610 = vunpack.c.h.b16 %v2066
    %v2611 = vunpack.c.l.b16 %v2067
    %v2612 = vunpack.c.h.b16 %v2067
    %v2613 = vunpack.c.l.b16 %v2068
    %v2614 = vunpack.c.h.b16 %v2068
    %v2615 = vunpack.c.l.b16 %v2069
    %v2616 = vunpack.c.h.b16 %v2069
    %v2617 = vunpack.c.l.b16 %v2070
    %v2618 = vunpack.c.h.b16 %v2070
    %v2619 = vunpack.c.l.b16 %v2071
    %v2620 = vunpack.c.h.b16 %v2071
    %v2621 = vunpack.c.l.b16 %v2072
    %v2622 = vunpack.c.h.b16 %v2072
    %v2623 = vunpack.c.l.b16 %v2073
    %v2624 = vunpack.c.h.b16 %v2073
    %v2625 = vunpack.c.l.b16 %v2074
    %v2626 = vunpack.c.h.b16 %v2074
    %v2627 = vunpack.c.l.b16 %v2075
    %v2628 = vunpack.c.h.b16 %v2075
    %v2629 = vunpack.c.l.b16 %v2076
    %v2630 = vunpack.c.h.b16 %v2076
    %v2631 = vunpack.c.l.b16 %v2077
    %v2632 = vunpack.c.h.b16 %v2077
    %v2633 = vunpack.c.l.b16 %v2078
    %v2634 = vunpack.c.h.b16 %v2078
    %v2635 = vunpack.c.l.b16 %v2079
    %v2636 = vunpack.c.h.b16 %v2079
    %v2637 = vunpack.c.l.b16 %v2080
    %v2638 = vunpack.c.h.b16 %v2080
    %v2639 = vunpack.c.l.b16 %v2081
    %v2640 = vunpack.c.h.b16 %v2081
    %v2641 = vunpack.c.l.b16 %v2082
    %v2642 = vunpack.c.h.b16 %v2082
    %v2643 = vunpack.c.l.b16 %v2083
    %v2644 = vunpack.c.h.b16 %v2083
    %v2645 = vunpack.c.l.b16 %v2084
    %v2646 = vunpack.c.h.b16 %v2084
    %v2647 = vunpack.c.l.b16 %v2085
    %v2648 = vunpack.c.h.b16 %v2085
    %v2649 = vunpack.c.l.b16 %v2086
    %v2650 = vunpack.c.h.b16 %v2086
    %v2651 = vunpack.c.l.b16 %v2087
    %v2652 = vunpack.c.h.b16 %v2087
    %v2653 = vunpack.c.l.b16 %v2088
    %v2654 = vunpack.c.h.b16 %v2088
    %v2655 = vunpack.c.l.b16 %v2089
    %v2656 = vunpack.c.h.b16 %v2089
    %v2657 = vunpack.c.l.b16 %v2090
    %v2658 = vunpack.c.h.b16 %v2090
    %v2659 = vunpack.c.l.b16 %v2091
    %v2660 = vunpack.c.h.b16 %v2091
    %v2661 = vunpack.c.l.b16 %v2092
    %v2662 = vunpack.c.h.b16 %v2092
    %v2663 = vunpack.c.l.b16 %v2093
    %v2664 = vunpack.c.h.b16 %v2093
    %v2665 = vunpack.c.l.b16 %v2094
    %v2666 = vunpack.c.h.b16 %v2094
    %v2667 = vunpack.c.l.b16 %v2095
    %v2668 = vunpack.c.h.b16 %v2095
    %v2669 = vunpack.c.l.b16 %v2096
    %v2670 = vunpack.c.h.b16 %v2096
    %v2671 = vunpack.c.l.b16 %v2097
    %v2672 = vunpack.c.h.b16 %v2097
    %v2673 = vunpack.c.l.b16 %v2098
    %v2674 = vunpack.c.h.b16 %v2098
    %v2675 = vunpack.c.l.b16 %v2099
    %v2676 = vunpack.c.h.b16 %v2099
    %v2677 = vunpack.c.l.b16 %v2100
    %v2678 = vunpack.c.h.b16 %v2100
    %v2679 = vunpack.c.l.b16 %v2101
    %v2680 = vunpack.c.h.b16 %v2101
    %v2681 = vunpack.c.l.b16 %v2102
    %v2682 = vunpack.c.h.b16 %v2102
    %v2683 = vunpack.c.l.b16 %v2103
    %v2684 = vunpack.c.h.b16 %v2103
    %v2685 = vunpack.c.l.b16 %v2104
    %v2686 = vunpack.c.h.b16 %v2104
    %v2687 = vunpack.c.l.b16 %v2105
    %v2688 = vunpack.c.h.b16 %v2105
    %v2689 = vunpack.c.l.b16 %v2106
    %v2690 = vunpack.c.h.b16 %v2106
    %v2691 = vunpack.c.l.b16 %v2107
    %v2692 = vunpack.c.h.b16 %v2107
    %v2693 = vunpack.c.l.b16 %v2108
    %v2694 = vunpack.c.h.b16 %v2108
    %v2695 = vunpack.c.l.b16 %v2109
    %v2696 = vunpack.c.h.b16 %v2109
    %v2697 = vunpack.c.l.b16 %v2110
    %v2698 = vunpack.c.h.b16 %v2110
    %v2699 = vunpack.c.l.b16 %v2111
    %v2700 = vunpack.c.h.b16 %v2111
    %v2701 = vunpack.c.l.b16 %v2112
    %v2702 = vunpack.c.h.b16 %v2112
    %v2703 = vunpack.c.l.b16 %v2113
    %v2704 = vunpack.c.h.b16 %v2113
    %v2705 = vunpack.c.l.b16 %v2114
    %v2706 = vunpack.c.h.b16 %v2114
    %v2707 = vunpack.c.l.b16 %v2115
    %v2708 = vunpack.c.h.b16 %v2115
    %v2709 = vunpack.c.l.b16 %v2116
    %v2710 = vunpack.c.h.b16 %v2116
    %v2711 = vunpack.c.l.b16 %v2117
    %v2712 = vunpack.c.h.b16 %v2117
    %v2713 = vunpack.c.l.b16 %v2118
    %v2714 = vunpack.c.h.b16 %v2118
    %v2715 = vunpack.c.l.b16 %v2119
    %v2716 = vunpack.c.h.b16 %v2119
    %v2717 = vunpack.c.l.b16 %v2120
    %v2718 = vunpack.c.h.b16 %v2120
    %v2719 = vpack.c.b16 %v2339, %v2335
    %v2720 = vpack.c.b16 %v2340, %v2336
    %v2721 = vpack.c.b16 %v2341, %v2337
    %v2722 = vpack.c.b16 %v2342, %v2338
    %v2723 = vpack.c.b16 %v2347, %v2343
    %v2724 = vpack.c.b16 %v2348, %v2344
    %v2725 = vpack.c.b16 %v2349, %v2345
    %v2726 = vpack.c.b16 %v2350, %v2346
    %v2727 = vpack.c.b16 %v2355, %v2351
    %v2728 = vpack.c.b16 %v2356, %v2352
    %v2729 = vpack.c.b16 %v2357, %v2353
    %v2730 = vpack.c.b16 %v2358, %v2354
    %v2731 = vpack.c.b16 %v2363, %v2359
    %v2732 = vpack.c.b16 %v2364, %v2360
    %v2733 = vpack.c.b16 %v2365, %v2361
    %v2734 = vpack.c.b16 %v2366, %v2362
    %v2735 = vpack.c.b16 %v2371, %v2367
    %v2736 = vpack.c.b16 %v2372, %v2368
    %v2737 = vpack.c.b16 %v2373, %v2369
    %v2738 = vpack.c.b16 %v2374, %v2370
    %v2739 = vpack.c.b16 %v2379, %v2375
    %v2740 = vpack.c.b16 %v2380, %v2376
    %v2741 = vpack.c.b16 %v2381, %v2377
    %v2742 = vpack.c.b16 %v2382, %v2378
    %v2743 = vpack.c.b16 %v2387, %v2383
    %v2744 = vpack.c.b16 %v2388, %v2384
    %v2745 = vpack.c.b16 %v2389, %v2385
    %v2746 = vpack.c.b16 %v2390, %v2386
    %v2747 = vpack.c.b16 %v2395, %v2391
    %v2748 = vpack.c.b16 %v2396, %v2392
    %v2749 = vpack.c.b16 %v2397, %v2393
    %v2750 = vpack.c.b16 %v2398, %v2394
    %v2751 = vpack.c.b16 %v2403, %v2399
    %v2752 = vpack.c.b16 %v2404, %v2400
    %v2753 = vpack.c.b16 %v2405, %v2401
    %v2754 = vpack.c.b16 %v2406, %v2402
    %v2755 = vpack.c.b16 %v2411, %v2407
    %v2756 = vpack.c.b16 %v2412, %v2408
    %v2757 = vpack.c.b16 %v2413, %v2409
    %v2758 = vpack.c.b16 %v2414, %v2410
    %v2759 = vpack.c.b16 %v2419, %v2415
    %v2760 = vpack.c.b16 %v2420, %v2416
    %v2761 = vpack.c.b16 %v2421, %v2417
    %v2762 = vpack.c.b16 %v2422, %v2418
    %v2763 = vpack.c.b16 %v2427, %v2423
    %v2764 = vpack.c.b16 %v2428, %v2424
    %v2765 = vpack.c.b16 %v2429, %v2425
    %v2766 = vpack.c.b16 %v2430, %v2426
    %v2767 = vpack.c.b16 %v2435, %v2431
    %v2768 = vpack.c.b16 %v2436, %v2432
    %v2769 = vpack.c.b16 %v2437, %v2433
    %v2770 = vpack.c.b16 %v2438, %v2434
    %v2771 = vpack.c.b16 %v2443, %v2439
    %v2772 = vpack.c.b16 %v2444, %v2440
    %v2773 = vpack.c.b16 %v2445, %v2441
    %v2774 = vpack.c.b16 %v2446, %v2442
    %v2775 = vpack.c.b16 %v2451, %v2447
    %v2776 = vpack.c.b16 %v2452, %v2448
    %v2777 = vpack.c.b16 %v2453, %v2449
    %v2778 = vpack.c.b16 %v2454, %v2450
    %v2779 = vpack.c.b16 %v2459, %v2455
    %v2780 = vpack.c.b16 %v2460, %v2456
    %v2781 = vpack.c.b16 %v2461, %v2457
    %v2782 = vpack.c.b16 %v2462, %v2458
    %v2783 = vpack.c.b16 %v2467, %v2463
    %v2784 = vpack.c.b16 %v2468, %v2464
    %v2785 = vpack.c.b16 %v2469, %v2465
    %v2786 = vpack.c.b16 %v2470, %v2466
    %v2787 = vpack.c.b16 %v2475, %v2471
    %v2788 = vpack.c.b16 %v2476, %v2472
    %v2789 = vpack.c.b16 %v2477, %v2473
    %v2790 = vpack.c.b16 %v2478, %v2474
    %v2791 = vpack.c.b16 %v2483, %v2479
    %v2792 = vpack.c.b16 %v2484, %v2480
    %v2793 = vpack.c.b16 %v2485, %v2481
    %v2794 = vpack.c.b16 %v2486, %v2482
    %v2795 = vpack.c.b16 %v2491, %v2487
    %v2796 = vpack.c.b16 %v2492, %v2488
    %v2797 = vpack.c.b16 %v2493, %v2489
    %v2798 = vpack.c.b16 %v2494, %v2490
    %v2799 = vpack.c.b16 %v2499, %v2495
    %v2800 = vpack.c.b16 %v2500, %v2496
    %v2801 = vpack.c.b16 %v2501, %v2497
    %v2802 = vpack.c.b16 %v2502, %v2498
    %v2803 = vpack.c.b16 %v2507, %v2503
    %v2804 = vpack.c.b16 %v2508, %v2504
    %v2805 = vpack.c.b16 %v2509, %v2505
    %v2806 = vpack.c.b16 %v2510, %v2506
    %v2807 = vpack.c.b16 %v2515, %v2511
    %v2808 = vpack.c.b16 %v2516, %v2512
    %v2809 = vpack.c.b16 %v2517, %v2513
    %v2810 = vpack.c.b16 %v2518, %v2514
    %v2811 = vpack.c.b16 %v2523, %v2519
    %v2812 = vpack.c.b16 %v2524, %v2520
    %v2813 = vpack.c.b16 %v2525, %v2521
    %v2814 = vpack.c.b16 %v2526, %v2522
    %v2815 = vpack.c.b16 %v2531, %v2527
    %v2816 = vpack.c.b16 %v2532, %v2528
    %v2817 = vpack.c.b16 %v2533, %v2529
    %v2818 = vpack.c.b16 %v2534, %v2530
    %v2819 = vpack.c.b16 %v2539, %v2535
    %v2820 = vpack.c.b16 %v2540, %v2536
    %v2821 = vpack.c.b16 %v2541, %v2537
    %v2822 = vpack.c.b16 %v2542, %v2538
    %v2823 = vpack.c.b16 %v2547, %v2543
    %v2824 = vpack.c.b16 %v2548, %v2544
    %v2825 = vpack.c.b16 %v2549, %v2545
    %v2826 = vpack.c.b16 %v2550, %v2546
    %v2827 = vpack.c.b16 %v2555, %v2551
    %v2828 = vpack.c.b16 %v2556, %v2552
    %v2829 = vpack.c.b16 %v2557, %v2553
    %v2830 = vpack.c.b16 %v2558, %v2554
    %v2831 = vpack.c.b16 %v2563, %v2559
    %v2832 = vpack.c.b16 %v2564, %v2560
    %v2833 = vpack.c.b16 %v2565, %v2561
    %v2834 = vpack.c.b16 %v2566, %v2562
    %v2835 = vpack.c.b16 %v2571, %v2567
    %v2836 = vpack.c.b16 %v2572, %v2568
    %v2837 = vpack.c.b16 %v2573, %v2569
    %v2838 = vpack.c.b16 %v2574, %v2570
    %v2839 = vpack.c.b16 %v2579, %v2575
    %v2840 = vpack.c.b16 %v2580, %v2576
    %v2841 = vpack.c.b16 %v2581, %v2577
    %v2842 = vpack.c.b16 %v2582, %v2578
    %v2843 = vpack.c.b16 %v2587, %v2583
    %v2844 = vpack.c.b16 %v2588, %v2584
    %v2845 = vpack.c.b16 %v2589, %v2585
    %v2846 = vpack.c.b16 %v2590, %v2586
    %v2847 = vpack.c.b16 %v2595, %v2591
    %v2848 = vpack.c.b16 %v2596, %v2592
    %v2849 = vpack.c.b16 %v2597, %v2593
    %v2850 = vpack.c.b16 %v2598, %v2594
    %v2851 = vpack.c.b16 %v2603, %v2599
    %v2852 = vpack.c.b16 %v2604, %v2600
    %v2853 = vpack.c.b16 %v2605, %v2601
    %v2854 = vpack.c.b16 %v2606, %v2602
    %v2855 = vpack.c.b16 %v2611, %v2607
    %v2856 = vpack.c.b16 %v2612, %v2608
    %v2857 = vpack.c.b16 %v2613, %v2609
    %v2858 = vpack.c.b16 %v2614, %v2610
    %v2859 = vpack.c.b16 %v2619, %v2615
    %v2860 = vpack.c.b16 %v2620, %v2616
    %v2861 = vpack.c.b16 %v2621, %v2617
    %v2862 = vpack.c.b16 %v2622, %v2618
    %v2863 = vpack.c.b16 %v2627, %v2623
    %v2864 = vpack.c.b16 %v2628, %v2624
    %v2865 = vpack.c.b16 %v2629, %v2625
    %v2866 = vpack.c.b16 %v2630, %v2626
    %v2867 = vpack.c.b16 %v2635, %v2631
    %v2868 = vpack.c.b16 %v2636, %v2632
    %v2869 = vpack.c.b16 %v2637, %v2633
    %v2870 = vpack.c.b16 %v2638, %v2634
    %v2871 = vpack.c.b16 %v2643, %v2639
    %v2872 = vpack.c.b16 %v2644, %v2640
    %v2873 = vpack.c.b16 %v2645, %v2641
    %v2874 = vpack.c.b16 %v2646, %v2642
    %v2875 = vpack.c.b16 %v2651, %v2647
    %v2876 = vpack.c.b16 %v2652, %v2648
    %v2877 = vpack.c.b16 %v2653, %v2649
    %v2878 = vpack.c.b16 %v2654, %v2650
    %v2879 = vpack.c.b16 %v2659, %v2655
    %v2880 = vpack.c.b16 %v2660, %v2656
    %v2881 = vpack.c.b16 %v2661, %v2657
    %v2882 = vpack.c.b16 %v2662, %v2658
    %v2883 = vpack.c.b16 %v2667, %v2663
    %v2884 = vpack.c.b16 %v2668, %v2664
    %v2885 = vpack.c.b16 %v2669, %v2665
    %v2886 = vpack.c.b16 %v2670, %v2666
    %v2887 = vpack.c.b16 %v2675, %v2671
    %v2888 = vpack.c.b16 %v2676, %v2672
    %v2889 = vpack.c.b16 %v2677, %v2673
    %v2890 = vpack.c.b16 %v2678, %v2674
    %v2891 = vpack.c.b16 %v2683, %v2679
    %v2892 = vpack.c.b16 %v2684, %v2680
    %v2893 = vpack.c.b16 %v2685, %v2681
    %v2894 = vpack.c.b16 %v2686, %v2682
    %v2895 = vpack.c.b16 %v2691, %v2687
    %v2896 = vpack.c.b16 %v2692, %v2688
    %v2897 = vpack.c.b16 %v2693, %v2689
    %v2898 = vpack.c.b16 %v2694, %v2690
    %v2899 = vpack.c.b16 %v2699, %v2695
    %v2900 = vpack.c.b16 %v2700, %v2696
    %v2901 = vpack.c.b16 %v2701, %v2697
    %v2902 = vpack.c.b16 %v2702, %v2698
    %v2903 = vpack.c.b16 %v2707, %v2703
    %v2904 = vpack.c.b16 %v2708, %v2704
    %v2905 = vpack.c.b16 %v2709, %v2705
    %v2906 = vpack.c.b16 %v2710, %v2706
    %v2907 = vpack.c.b16 %v2715, %v2711
    %v2908 = vpack.c.b16 %v2716, %v2712
    %v2909 = vpack.c.b16 %v2717, %v2713
    %v2910 = vpack.c.b16 %v2718, %v2714
    %3103 = vmatprep.subr.bf16.mxu0 %v2720
    %3104 = vmatpush1.bf16.msra.mxu0 %v2719
    %3105 = vmatprep.subr.bf16.mxu0 %v2724
    %3106 = vmatpush1.bf16.msra.mxu0 %v2723
    %3107 = vmatprep.subr.bf16.mxu0 %v2728
    %3108 = vmatpush1.bf16.msra.mxu0 %v2727
    %3109 = vmatprep.subr.bf16.mxu0 %v2732
    %3110 = vmatpush1.bf16.msra.mxu0 %v2731
    %3111 = vmatprep.subr.bf16.mxu0 %v2736
    %3112 = vmatpush1.bf16.msra.mxu0 %v2735
    %3113 = vmatprep.subr.bf16.mxu0 %v2740
    %3114 = vmatpush1.bf16.msra.mxu0 %v2739
    %3115 = vmatprep.subr.bf16.mxu0 %v2744
    %3116 = vmatpush1.bf16.msra.mxu0 %v2743
    %3117 = vmatprep.subr.bf16.mxu0 %v2748
    %3118 = vmatpush1.bf16.msra.mxu0 %v2747
    %3119 = vmatprep.subr.bf16.mxu0 %v2752
    %3120 = vmatpush1.bf16.msra.mxu0 %v2751
    %3121 = vmatprep.subr.bf16.mxu0 %v2756
    %3122 = vmatpush1.bf16.msra.mxu0 %v2755
    %3123 = vmatprep.subr.bf16.mxu0 %v2760
    %3124 = vmatpush1.bf16.msra.mxu0 %v2759
    %3125 = vmatprep.subr.bf16.mxu0 %v2764
    %3126 = vmatpush1.bf16.msra.mxu0 %v2763
    %3127 = vmatprep.subr.bf16.mxu0 %v2768
    %3128 = vmatpush1.bf16.msra.mxu0 %v2767
    %3129 = vmatprep.subr.bf16.mxu0 %v2772
    %3130 = vmatpush1.bf16.msra.mxu0 %v2771
    %3131 = vmatprep.subr.bf16.mxu0 %v2776
    %3132 = vmatpush1.bf16.msra.mxu0 %v2775
    %3133 = vmatprep.subr.bf16.mxu0 %v2780
    %3134 = vmatpush1.bf16.msra.mxu0 %v2779
    %3135 = vmatprep.mubr.bf16.mxu0 %v1924
    %3136 = vmatmul.mubr.bf16.gmra.mrb[0].mxu0 %v1923
    %v3137 = vpop.f32.mrb[0].mxu0
    %v3138 = vadd.f32 %v2126, %v3137
    %v3139 = vpop.f32.mrb[0].mxu0
    %v3140 = vadd.f32 %v2130, %v3139
    %v3141 = vpop.f32.mrb[0].mxu0
    %v3142 = vpop.f32.mrb[0].mxu0
    %3143 = vdwg.mxu0
    %3144 = vmatprep.subr.bf16.mxu0 %v2784
    %3145 = vmatpush1.bf16.msra.mxu0 %v2783
    %3146 = vmatprep.subr.bf16.mxu0 %v2788
    %3147 = vmatpush1.bf16.msra.mxu0 %v2787
    %3148 = vmatprep.subr.bf16.mxu0 %v2792
    %3149 = vmatpush1.bf16.msra.mxu0 %v2791
    %3150 = vmatprep.subr.bf16.mxu0 %v2796
    %3151 = vmatpush1.bf16.msra.mxu0 %v2795
    %3152 = vmatprep.subr.bf16.mxu0 %v2800
    %3153 = vmatpush1.bf16.msra.mxu0 %v2799
    %3154 = vmatprep.subr.bf16.mxu0 %v2804
    %3155 = vmatpush1.bf16.msra.mxu0 %v2803
    %3156 = vmatprep.subr.bf16.mxu0 %v2808
    %3157 = vmatpush1.bf16.msra.mxu0 %v2807
    %3158 = vmatprep.subr.bf16.mxu0 %v2812
    %3159 = vmatpush1.bf16.msra.mxu0 %v2811
    %3160 = vmatprep.subr.bf16.mxu0 %v2816
    %3161 = vmatpush1.bf16.msra.mxu0 %v2815
    %3162 = vmatprep.subr.bf16.mxu0 %v2820
    %3163 = vmatpush1.bf16.msra.mxu0 %v2819
    %3164 = vmatprep.subr.bf16.mxu0 %v2824
    %3165 = vmatpush1.bf16.msra.mxu0 %v2823
    %3166 = vmatprep.subr.bf16.mxu0 %v2828
    %3167 = vmatpush1.bf16.msra.mxu0 %v2827
    %3168 = vmatprep.subr.bf16.mxu0 %v2832
    %3169 = vmatpush1.bf16.msra.mxu0 %v2831
    %3170 = vmatprep.subr.bf16.mxu0 %v2836
    %3171 = vmatpush1.bf16.msra.mxu0 %v2835
    %3172 = vmatprep.subr.bf16.mxu0 %v2840
    %3173 = vmatpush1.bf16.msra.mxu0 %v2839
    %3174 = vmatprep.subr.bf16.mxu0 %v2844
    %3175 = vmatpush1.bf16.msra.mxu0 %v2843
    %3176 = vmatprep.mubr.bf16.mxu0 %v1926
    %3177 = vmatmul.mubr.bf16.gmra.mrb[0].mxu0 %v1925
    %v3178 = vpop.f32.mrb[0].mxu0
    %v3179 = vadd.f32 %v3138, %v3178
    %v3180 = vpop.f32.mrb[0].mxu0
    %v3181 = vadd.f32 %v3140, %v3180
    %v3182 = vpop.f32.mrb[0].mxu0
    %v3183 = vpop.f32.mrb[0].mxu0
    %3184 = vdwg.mxu0
    %3185 = vmatprep.subr.bf16.mxu0 %v2848
    %3186 = vmatpush1.bf16.msra.mxu0 %v2847
    %3187 = vmatprep.subr.bf16.mxu0 %v2852
    %3188 = vmatpush1.bf16.msra.mxu0 %v2851
    %3189 = vmatprep.subr.bf16.mxu0 %v2856
    %3190 = vmatpush1.bf16.msra.mxu0 %v2855
    %3191 = vmatprep.subr.bf16.mxu0 %v2860
    %3192 = vmatpush1.bf16.msra.mxu0 %v2859
    %3193 = vmatprep.subr.bf16.mxu0 %v2864
    %3194 = vmatpush1.bf16.msra.mxu0 %v2863
    %3195 = vmatprep.subr.bf16.mxu0 %v2868
    %3196 = vmatpush1.bf16.msra.mxu0 %v2867
    %3197 = vmatprep.subr.bf16.mxu0 %v2872
    %3198 = vmatpush1.bf16.msra.mxu0 %v2871
    %3199 = vmatprep.subr.bf16.mxu0 %v2876
    %3200 = vmatpush1.bf16.msra.mxu0 %v2875
    %3201 = vmatprep.subr.bf16.mxu0 %v2880
    %3202 = vmatpush1.bf16.msra.mxu0 %v2879
    %3203 = vmatprep.subr.bf16.mxu0 %v2884
    %3204 = vmatpush1.bf16.msra.mxu0 %v2883
    %3205 = vmatprep.subr.bf16.mxu0 %v2888
    %3206 = vmatpush1.bf16.msra.mxu0 %v2887
    %3207 = vmatprep.subr.bf16.mxu0 %v2892
    %3208 = vmatpush1.bf16.msra.mxu0 %v2891
    %3209 = vmatprep.subr.bf16.mxu0 %v2896
    %3210 = vmatpush1.bf16.msra.mxu0 %v2895
    %3211 = vmatprep.subr.bf16.mxu0 %v2900
    %3212 = vmatpush1.bf16.msra.mxu0 %v2899
    %3213 = vmatprep.subr.bf16.mxu0 %v2904
    %3214 = vmatpush1.bf16.msra.mxu0 %v2903
    %3215 = vmatprep.subr.bf16.mxu0 %v2908
    %3216 = vmatpush1.bf16.msra.mxu0 %v2907
    %3217 = vmatprep.mubr.bf16.mxu0 %v1928
    %3218 = vmatmul.mubr.bf16.gmra.mrb[0].mxu0 %v1927
    %v3219 = vpop.f32.mrb[0].mxu0
    %v3220 = vadd.f32 %v3179, %v3219
    %v3221 = vpop.f32.mrb[0].mxu0
    %v3222 = vadd.f32 %v3181, %v3221
    %v3223 = vpop.f32.mrb[0].mxu0
    %v3224 = vpop.f32.mrb[0].mxu0
    %3225 = vdwg.mxu0
    %3226 = vmatprep.subr.bf16.mxu0 %v2722
    %3227 = vmatpush1.bf16.msra.mxu0 %v2721
    %3228 = vmatprep.subr.bf16.mxu0 %v2726
    %3229 = vmatpush1.bf16.msra.mxu0 %v2725
    %3230 = vmatprep.subr.bf16.mxu0 %v2730
    %3231 = vmatpush1.bf16.msra.mxu0 %v2729
    %3232 = vmatprep.subr.bf16.mxu0 %v2734
    %3233 = vmatpush1.bf16.msra.mxu0 %v2733
    %3234 = vmatprep.subr.bf16.mxu0 %v2738
    %3235 = vmatpush1.bf16.msra.mxu0 %v2737
    %3236 = vmatprep.subr.bf16.mxu0 %v2742
    %3237 = vmatpush1.bf16.msra.mxu0 %v2741
    %3238 = vmatprep.subr.bf16.mxu0 %v2746
    %3239 = vmatpush1.bf16.msra.mxu0 %v2745
    %3240 = vmatprep.subr.bf16.mxu0 %v2750
    %3241 = vmatpush1.bf16.msra.mxu0 %v2749
    %3242 = vmatprep.subr.bf16.mxu0 %v2754
    %3243 = vmatpush1.bf16.msra.mxu0 %v2753
    %3244 = vmatprep.subr.bf16.mxu0 %v2758
    %3245 = vmatpush1.bf16.msra.mxu0 %v2757
    %3246 = vmatprep.subr.bf16.mxu0 %v2762
    %3247 = vmatpush1.bf16.msra.mxu0 %v2761
    %3248 = vmatprep.subr.bf16.mxu0 %v2766
    %3249 = vmatpush1.bf16.msra.mxu0 %v2765
    %3250 = vmatprep.subr.bf16.mxu0 %v2770
    %3251 = vmatpush1.bf16.msra.mxu0 %v2769
    %3252 = vmatprep.subr.bf16.mxu0 %v2774
    %3253 = vmatpush1.bf16.msra.mxu0 %v2773
    %3254 = vmatprep.subr.bf16.mxu0 %v2778
    %3255 = vmatpush1.bf16.msra.mxu0 %v2777
    %3256 = vmatprep.subr.bf16.mxu0 %v2782
    %3257 = vmatpush1.bf16.msra.mxu0 %v2781
    %3258 = vmatprep.mubr.bf16.mxu0 %v1924
    %3259 = vmatmul.mubr.bf16.gmra.mrb[0].mxu0 %v1923
    %v3260 = vpop.f32.mrb[0].mxu0
    %v3261 = vadd.f32 %v2134, %v3260
    %v3262 = vpop.f32.mrb[0].mxu0
    %v3263 = vadd.f32 %v2138, %v3262
    %v3264 = vpop.f32.mrb[0].mxu0
    %v3265 = vpop.f32.mrb[0].mxu0
    %3266 = vdwg.mxu0
    %3267 = vmatprep.subr.bf16.mxu0 %v2786
    %3268 = vmatpush1.bf16.msra.mxu0 %v2785
    %3269 = vmatprep.subr.bf16.mxu0 %v2790
    %3270 = vmatpush1.bf16.msra.mxu0 %v2789
    %3271 = vmatprep.subr.bf16.mxu0 %v2794
    %3272 = vmatpush1.bf16.msra.mxu0 %v2793
    %3273 = vmatprep.subr.bf16.mxu0 %v2798
    %3274 = vmatpush1.bf16.msra.mxu0 %v2797
    %3275 = vmatprep.subr.bf16.mxu0 %v2802
    %3276 = vmatpush1.bf16.msra.mxu0 %v2801
    %3277 = vmatprep.subr.bf16.mxu0 %v2806
    %3278 = vmatpush1.bf16.msra.mxu0 %v2805
    %3279 = vmatprep.subr.bf16.mxu0 %v2810
    %3280 = vmatpush1.bf16.msra.mxu0 %v2809
    %3281 = vmatprep.subr.bf16.mxu0 %v2814
    %3282 = vmatpush1.bf16.msra.mxu0 %v2813
    %3283 = vmatprep.subr.bf16.mxu0 %v2818
    %3284 = vmatpush1.bf16.msra.mxu0 %v2817
    %3285 = vmatprep.subr.bf16.mxu0 %v2822
    %3286 = vmatpush1.bf16.msra.mxu0 %v2821
    %3287 = vmatprep.subr.bf16.mxu0 %v2826
    %3288 = vmatpush1.bf16.msra.mxu0 %v2825
    %3289 = vmatprep.subr.bf16.mxu0 %v2830
    %3290 = vmatpush1.bf16.msra.mxu0 %v2829
    %3291 = vmatprep.subr.bf16.mxu0 %v2834
    %3292 = vmatpush1.bf16.msra.mxu0 %v2833
    %3293 = vmatprep.subr.bf16.mxu0 %v2838
    %3294 = vmatpush1.bf16.msra.mxu0 %v2837
    %3295 = vmatprep.subr.bf16.mxu0 %v2842
    %3296 = vmatpush1.bf16.msra.mxu0 %v2841
    %3297 = vmatprep.subr.bf16.mxu0 %v2846
    %3298 = vmatpush1.bf16.msra.mxu0 %v2845
    %3299 = vmatprep.mubr.bf16.mxu0 %v1926
    %3300 = vmatmul.mubr.bf16.gmra.mrb[0].mxu0 %v1925
    %v3301 = vpop.f32.mrb[0].mxu0
    %v3302 = vadd.f32 %v3261, %v3301
    %v3303 = vpop.f32.mrb[0].mxu0
    %v3304 = vadd.f32 %v3263, %v3303
    %v3305 = vpop.f32.mrb[0].mxu0
    %v3306 = vpop.f32.mrb[0].mxu0
    %3307 = vdwg.mxu0
    %3308 = vmatprep.subr.bf16.mxu0 %v2850
    %3309 = vmatpush1.bf16.msra.mxu0 %v2849
    %3310 = vmatprep.subr.bf16.mxu0 %v2854
    %3311 = vmatpush1.bf16.msra.mxu0 %v2853
    %3312 = vmatprep.subr.bf16.mxu0 %v2858
    %3313 = vmatpush1.bf16.msra.mxu0 %v2857
    %3314 = vmatprep.subr.bf16.mxu0 %v2862
    %3315 = vmatpush1.bf16.msra.mxu0 %v2861
    %3316 = vmatprep.subr.bf16.mxu0 %v2866
    %3317 = vmatpush1.bf16.msra.mxu0 %v2865
    %3318 = vmatprep.subr.bf16.mxu0 %v2870
    %3319 = vmatpush1.bf16.msra.mxu0 %v2869
    %3320 = vmatprep.subr.bf16.mxu0 %v2874
    %3321 = vmatpush1.bf16.msra.mxu0 %v2873
    %3322 = vmatprep.subr.bf16.mxu0 %v2878
    %3323 = vmatpush1.bf16.msra.mxu0 %v2877
    %3324 = vmatprep.subr.bf16.mxu0 %v2882
    %3325 = vmatpush1.bf16.msra.mxu0 %v2881
    %3326 = vmatprep.subr.bf16.mxu0 %v2886
    %3327 = vmatpush1.bf16.msra.mxu0 %v2885
    %3328 = vmatprep.subr.bf16.mxu0 %v2890
    %3329 = vmatpush1.bf16.msra.mxu0 %v2889
    %3330 = vmatprep.subr.bf16.mxu0 %v2894
    %3331 = vmatpush1.bf16.msra.mxu0 %v2893
    %3332 = vmatprep.subr.bf16.mxu0 %v2898
    %3333 = vmatpush1.bf16.msra.mxu0 %v2897
    %3334 = vmatprep.subr.bf16.mxu0 %v2902
    %3335 = vmatpush1.bf16.msra.mxu0 %v2901
    %3336 = vmatprep.subr.bf16.mxu0 %v2906
    %3337 = vmatpush1.bf16.msra.mxu0 %v2905
    %3338 = vmatprep.subr.bf16.mxu0 %v2910
    %3339 = vmatpush1.bf16.msra.mxu0 %v2909
    %3340 = vmatprep.mubr.bf16.mxu0 %v1928
    %3341 = vmatmul.mubr.bf16.gmra.mrb[0].mxu0 %v1927
    %v3342 = vpop.f32.mrb[0].mxu0
    %v3343 = vadd.f32 %v3302, %v3342
    %v3344 = vpop.f32.mrb[0].mxu0
    %v3345 = vadd.f32 %v3304, %v3344
    %v3346 = vpop.f32.mrb[0].mxu0
    %v3347 = vpop.f32.mrb[0].mxu0
    %3348 = vdwg.mxu0
    %v3349 = vmul.f32 %v3220, %v3220
    %v3350 = vmul.f32 %v3222, %v3222
    %v3351 = vmul.f32 %v3343, %v3343
    %v3352 = vmul.f32 %v3345, %v3345
    %vm3353 = vcmask 1041408
    %v3354 = vsel %vm3353, %v3349, 0.0
    %v3355 = vsel %vm3353, %v3350, 0.0
    %v3356 = vadd.f32 %v3354, %v3355
    %v3357 = vsel %vm3353, %v3351, 0.0
    %v3358 = vadd.f32 %v3356, %v3357
    %v3359 = vsel %vm3353, %v3352, 0.0
    %v3360 = vadd.f32 %v3358, %v3359
    %3361 = vadd.xlane.f32.xlu0 %v3360
    %v3362 = vpop.xlane.xlu0 %3361
    %v3363 = vadd.f32 %v3362, 1e-12
    %v3364 = vrsqrt.pop %v3363
    %v3365 = vmul.f32 %v3220, %v3364
    %v3366 = vmul.f32 %v3222, %v3364
    %v3367 = vmul.f32 %v3343, %v3364
    %v3368 = vmul.f32 %v3345, %v3364
    %v3369 = vmul.f32 %v1759, %v1759
    %v3370 = vmul.f32 %v1761, %v1761
    %v3371 = vmul.f32 %v1882, %v1882
    %v3372 = vmul.f32 %v1884, %v1884
    %v3373 = vsel %vm73, %v3369, 0.0
    %v3374 = vsel %vm73, %v3370, 0.0
    %v3375 = vadd.f32 %v3373, %v3374
    %v3376 = vsel %vm73, %v3371, 0.0
    %v3377 = vadd.f32 %v3375, %v3376
    %v3378 = vsel %vm73, %v3372, 0.0
    %v3379 = vadd.f32 %v3377, %v3378
    %3380 = vadd.xlane.f32.xlu0 %v3379
    %v3381 = vpop.xlane.xlu0 %3380
    %v3382 = vadd.f32 %v3381, 1e-12
    %v3383 = vrsqrt.pop %v3382
    %v3384 = vmul.f32 %v1759, %v3383
    %v3385 = vmul.f32 %v1761, %v3383
    %v3386 = vmul.f32 %v1882, %v3383
    %v3387 = vmul.f32 %v1884, %v3383
    %s3388 = sld [smem:[#allocation3]]
    %v3389 = vstv %s3388
    %v3390 = vmul.f32 %v3389, 1.442695
    %v3391 = vpow.pop %v3390
    %s3392 = vtos %v3391
    %v3393 = vpack.c.bf16 %v3365, %v3365
    %v3394 = vpack.c.bf16 %v3366, %v3366
    %v3395 = vpack.c.bf16 %v3367, %v3367
    %v3396 = vpack.c.bf16 %v3368, %v3368
    %v3397 = vpack.c.bf16 %v3384, %v3384
    %v3398 = vpack.c.bf16 %v3385, %v3385
    %v3399 = vpack.c.bf16 %v3386, %v3386
    %v3400 = vpack.c.bf16 %v3387, %v3387
    %3401 = vmatprep.subr.bf16.mxu0 %v3398
    %3402 = vmatpush1.bf16.xpose.msra.mxu0 %v3397
    %3403 = vmatprep.subr.bf16.mxu0 0
    %3404 = vmatpush1.bf16.xpose.msra.mxu0 0
    %3405 = vmatprep.subr.bf16.mxu0 0
    %3406 = vmatpush1.bf16.xpose.msra.mxu0 0
    %3407 = vmatprep.subr.bf16.mxu0 0
    %3408 = vmatpush1.bf16.xpose.msra.mxu0 0
    %3409 = vmatprep.subr.bf16.mxu0 0
    %3410 = vmatpush1.bf16.xpose.msra.mxu0 0
    %3411 = vmatprep.subr.bf16.mxu0 0
    %3412 = vmatpush1.bf16.xpose.msra.mxu0 0
    %3413 = vmatprep.subr.bf16.mxu0 0
    %3414 = vmatpush1.bf16.xpose.msra.mxu0 0
    %3415 = vmatprep.subr.bf16.mxu0 0
    %3416 = vmatpush1.bf16.xpose.msra.mxu0 0
    %3417 = vmatprep.subr.bf16.mxu0 0
    %3418 = vmatpush1.bf16.xpose.msra.mxu0 0
    %3419 = vmatprep.subr.bf16.mxu0 0
    %3420 = vmatpush1.bf16.xpose.msra.mxu0 0
    %3421 = vmatprep.subr.bf16.mxu0 0
    %3422 = vmatpush1.bf16.xpose.msra.mxu0 0
    %3423 = vmatprep.subr.bf16.mxu0 0
    %3424 = vmatpush1.bf16.xpose.msra.mxu0 0
    %3425 = vmatprep.subr.bf16.mxu0 0
    %3426 = vmatpush1.bf16.xpose.msra.mxu0 0
    %3427 = vmatprep.subr.bf16.mxu0 0
    %3428 = vmatpush1.bf16.xpose.msra.mxu0 0
    %3429 = vmatprep.subr.bf16.mxu0 0
    %3430 = vmatpush1.bf16.xpose.msra.mxu0 0
    %3431 = vmatprep.subr.bf16.mxu0 0
    %3432 = vmatpush1.bf16.xpose.msra.mxu0 0
    %3433 = vmatprep.mubr.bf16.mxu0 %v3394
    %3434 = vmatmul.mubr.bf16.gmra.mrb[0].mxu0 %v3393
    %v3435 = vpop.f32.mrb[0].mxu0
    %v3436 = vadd.f32 0.0, %v3435
    %v3437 = vpop.f32.mrb[0].mxu0
    %v3438 = vpop.f32.mrb[0].mxu0
    %v3439 = vpop.f32.mrb[0].mxu0
    %3440 = vdwg.mxu0
    %3441 = vmatprep.subr.bf16.mxu0 %v3400
    %3442 = vmatpush1.bf16.xpose.msra.mxu0 %v3399
    %3443 = vmatprep.subr.bf16.mxu0 0
    %3444 = vmatpush1.bf16.xpose.msra.mxu0 0
    %3445 = vmatprep.subr.bf16.mxu0 0
    %3446 = vmatpush1.bf16.xpose.msra.mxu0 0
    %3447 = vmatprep.subr.bf16.mxu0 0
    %3448 = vmatpush1.bf16.xpose.msra.mxu0 0
    %3449 = vmatprep.subr.bf16.mxu0 0
    %3450 = vmatpush1.bf16.xpose.msra.mxu0 0
    %3451 = vmatprep.subr.bf16.mxu0 0
    %3452 = vmatpush1.bf16.xpose.msra.mxu0 0
    %3453 = vmatprep.subr.bf16.mxu0 0
    %3454 = vmatpush1.bf16.xpose.msra.mxu0 0
    %3455 = vmatprep.subr.bf16.mxu0 0
    %3456 = vmatpush1.bf16.xpose.msra.mxu0 0
    %3457 = vmatprep.subr.bf16.mxu0 0
    %3458 = vmatpush1.bf16.xpose.msra.mxu0 0
    %3459 = vmatprep.subr.bf16.mxu0 0
    %3460 = vmatpush1.bf16.xpose.msra.mxu0 0
    %3461 = vmatprep.subr.bf16.mxu0 0
    %3462 = vmatpush1.bf16.xpose.msra.mxu0 0
    %3463 = vmatprep.subr.bf16.mxu0 0
    %3464 = vmatpush1.bf16.xpose.msra.mxu0 0
    %3465 = vmatprep.subr.bf16.mxu0 0
    %3466 = vmatpush1.bf16.xpose.msra.mxu0 0
    %3467 = vmatprep.subr.bf16.mxu0 0
    %3468 = vmatpush1.bf16.xpose.msra.mxu0 0
    %3469 = vmatprep.subr.bf16.mxu0 0
    %3470 = vmatpush1.bf16.xpose.msra.mxu0 0
    %3471 = vmatprep.subr.bf16.mxu0 0
    %3472 = vmatpush1.bf16.xpose.msra.mxu0 0
    %3473 = vmatprep.mubr.bf16.mxu0 %v3396
    %3474 = vmatmul.mubr.bf16.gmra.mrb[0].mxu0 %v3395
    %v3475 = vpop.f32.mrb[0].mxu0
    %v3476 = vadd.f32 %v3436, %v3475
    %v3477 = vpop.f32.mrb[0].mxu0
    %v3478 = vpop.f32.mrb[0].mxu0
    %v3479 = vpop.f32.mrb[0].mxu0
    %3480 = vdwg.mxu0
    %v3481 = vstv %s3392
    %v3482 = vmul.f32 %v3481, %v3476
    %vm3483 = vcmask 25600
    %3484 = vst.msk [vmem:[#allocation9] sm:$0x3] %vm3483, %v3482
    // Predicated region
    $region42: #{tpu_custom_call.1} parent=1 // pred_check
      _
    $region43: #{tpu_custom_call.1} parent=1 // pred_check_branch
      %3486 = sbr.rel (0) target = $region45
    $region44: #{tpu_custom_call.1} parent=1 // pred_region
      %s3488 = ssub.s32 32, 32
      %3489 = vsyncadd [#allocation6], %s3488
      %s3491 = sshll.u32 [#allocation9], 4
      %s3492 = int_to_ptr.vmem [resolvable:$true] %s3491
      %3494 = dma.vmem_to_hbm [thread:$0]  %s3492, 32, %s9, [#allocation6]
    $region45: #{tpu_custom_call.1} parent=1 // pred_fallthru
      _
    // Predicated region
    $region46: #{tpu_custom_call.1} parent=1 // pred_check
      _
    $region47: #{tpu_custom_call.1} parent=1 // pred_check_branch
      %3496 = sbr.rel (0) target = $region49
    $region48: #{tpu_custom_call.1} parent=1 // pred_region
      %3497 = dma.done [#allocation6], 32
    $region49: #{tpu_custom_call.1} parent=1 // pred_fallthru
      _
    %3498 = vsyncpa [#allocation5], 1
    %3499 = vsyncpa [#allocation8], 1
    %3500 = vsyncpa [#allocation6], 1

</llo_original>
